<compile_context>
chip_gen: v7x
topology: tpu7x:2x2x1
jax: 0.10.0
libtpu: 0.0.40
codegen_flags: <defaults>
</compile_context>

<pallas_src>
import functools
import math

import jax
import jax.numpy as jnp
import numpy as np
from jax import lax
from jax.experimental import pallas as pl
from jax.experimental.pallas import tpu as pltpu


# Scores: (Lq, Dh) x (Lk, Dh) contracted on the last dims -> (Lq, Lk).  The K operand is
# consumed in transposed form, so there is no explicit .T (XLU transpose) in-kernel.
_SCORE_DIMS = (((1,), (1,)), ((), ()))


def _mha_kernel(q_ref, k_ref, v_ref, w_in_ref, b_in_ref, w_out_ref, b_out_ref,
                out_ref, qp_ref, kp_ref, vp_ref, o_slab_ref, *, num_heads):
    """One grid step: full MHA forward for one batch element and one Lq tile."""
    H = num_heads
    dt = q_ref.dtype
    E = q_ref.shape[-1]
    Dh = E // H

    # --- Lane-dense input projections: one (L,E)@(E,E) MXU matmul each. -----------------
    # Weights were transposed / scaled / pre-cast host-side; biases are lane-dense (1,E)
    # rows added after the big matmuls.
    qp_ref[...] = (jnp.dot(q_ref[0], w_in_ref[0],
                           preferred_element_type=jnp.float32) + b_in_ref[0]).astype(dt)
    kp_ref[...] = (jnp.dot(k_ref[0], w_in_ref[1],
                           preferred_element_type=jnp.float32) + b_in_ref[1]).astype(dt)
    vp_ref[...] = (jnp.dot(v_ref[0], w_in_ref[2],
                           preferred_element_type=jnp.float32) + b_in_ref[2]).astype(dt)

    # --- Per-head attention core. --------------------------------------------------------
    # Heads live as static lane slices of the projected activations in VMEM scratch; the
    # per-head outputs land at their lane offset in a lane-dense (block_q, E) slab.  The
    # K=Dh score / N=Dh PV contractions are inherent to MHA; the projections above and the
    # out-proj below already run the MXU full-width.
    for h in range(H):                                  # static unroll; H is small
        sl = slice(h * Dh, (h + 1) * Dh)
        s = lax.dot_general(qp_ref[:, sl], kp_ref[:, sl], _SCORE_DIMS,
                            preferred_element_type=jnp.float32)         # (block_q, Lk)
        s = s - jnp.max(s, axis=-1, keepdims=True)
        p = jnp.exp(s)
        p = p * pl.reciprocal(jnp.sum(p, axis=-1, keepdims=True), approx=True)
        o_slab_ref[:, sl] = jnp.dot(p.astype(dt), vp_ref[:, sl],
                                    preferred_element_type=jnp.float32).astype(dt)

    # --- Head merge + output projection: ONE lane-dense (Lq,E)@(E,E) matmul. -------------
    y = jnp.dot(o_slab_ref[...], w_out_ref[...],
                preferred_element_type=jnp.float32) + b_out_ref[...]
    out_ref[0] = y.astype(out_ref.dtype)


def cross_attention_block(query, key, value, params, *, num_heads,
                          need_weights=False, block_q=None):
    """Pallas equivalent of CrossAttentionBlock.forward (need_weights=False)."""
    B, Lq, E = query.shape
    _, Lk, _ = key.shape
    if E % num_heads != 0:
        raise ValueError(f"embed_dim={E} must be divisible by num_heads={num_heads}")
    Dh = E // num_heads
    scale = 1.0 / math.sqrt(Dh)
    dt = query.dtype

    w_in, b_in, w_out, b_out = params          # (3E,E), (3E,), (E,E), (E,)
    wq, wk, wv = w_in[:E], w_in[E:2 * E], w_in[2 * E:]
    bq, bk, bv = b_in[:E], b_in[E:2 * E], b_in[2 * E:]

    # One-time host-side weight restructuring:
    #   * transpose to right-multiply form (x @ W.T -> x @ Wt): no in-kernel transposes,
    #   * fold the 1/sqrt(Dh) query scaling into Wq / bq,
    #   * pre-cast everything to the activation dtype so bf16 inputs keep bf16 MXU operands.
    #   (Folding the scale before a low-precision cast rounds slightly differently than
    #    post-matmul scaling; acceptable, documented.)
    w_in_t = jnp.stack([wq.T * scale, wk.T, wv.T]).astype(dt)            # (3, E, E)
    b_in_r = jnp.stack([(bq * scale).reshape(1, E),
                        bk.reshape(1, E),
                        bv.reshape(1, E)]).astype(dt)                    # (3, 1, E)
    w_out_t = w_out.T.astype(dt)                                         # (E, E)
    b_out_r = b_out.reshape(1, E).astype(dt)                             # (1, E)

    if block_q is None:
        block_q = Lq   # no redundant K/V re-projection; set < Lq to split B==1 on v7x
    if Lq % block_q != 0:
        raise ValueError(f"Lq={Lq} must be divisible by block_q={block_q}")
    grid = (B, Lq // block_q)

    kernel = functools.partial(_mha_kernel, num_heads=num_heads)

    attn_out = pl.pallas_call(
        kernel,
        out_shape=jax.ShapeDtypeStruct((B, Lq, E), dt),
        grid_spec=pltpu.PrefetchScalarGridSpec(
            num_scalar_prefetch=0,
            grid=grid,
            in_specs=[
                pl.BlockSpec((1, block_q, E), lambda b, i: (b, i, 0)),   # query tile
                pl.BlockSpec((1, Lk, E), lambda b, i: (b, 0, 0)),        # key
                pl.BlockSpec((1, Lk, E), lambda b, i: (b, 0, 0)),        # value
                # Grid-invariant weight blocks (constant index_map -> not re-fetched while
                # the block index is unchanged).  See module TODO re: Buffered(1) at big E.
                pl.BlockSpec((3, E, E), lambda b, i: (0, 0, 0)),         # [Wq*s, Wk, Wv]^T
                pl.BlockSpec((3, 1, E), lambda b, i: (0, 0, 0)),         # [bq*s, bk, bv] rows
                pl.BlockSpec((E, E), lambda b, i: (0, 0)),               # Wout^T
                pl.BlockSpec((1, E), lambda b, i: (0, 0)),               # bout row
            ],
            out_specs=pl.BlockSpec((1, block_q, E), lambda b, i: (b, i, 0)),
            scratch_shapes=[
                pltpu.VMEM((block_q, E), dt),   # projected Q (scaled)
                pltpu.VMEM((Lk, E), dt),        # projected K
                pltpu.VMEM((Lk, E), dt),        # projected V
                pltpu.VMEM((block_q, E), dt),   # lane-dense per-head output slab
            ],
        ),
        compiler_params=pltpu.CompilerParams(
            # Every grid point writes a disjoint output tile -> both axes parallel
            # (v7x megacore shards them across the two TensorCores).
            dimension_semantics=("parallel", "parallel"),
            # Explicit scoped-VMEM budget: above the 16/32 MiB defaults, comfortably below
            # every generation's physical VMEM (v5e/v6e 128 MiB, v7x 64 MiB).
            vmem_limit_bytes=48 * 1024 * 1024,
        ),
    )(query, key, value, w_in_t, b_in_r, w_out_t, b_out_r)

    # need_weights=False in the reference forward -> attention weights are None.
    return attn_out, None


def _reference_mha(query, key, value, params, num_heads):
    """Pure-JAX reference mirroring torch.nn.MultiheadAttention forward."""
    w_in, b_in, w_out, b_out = params
    B, Lq, E = query.shape
    Lk = key.shape[1]
    Dh = E // num_heads
    wq, wk, wv = w_in[:E], w_in[E:2 * E], w_in[2 * E:]
    bq, bk, bv = b_in[:E], b_in[E:2 * E], b_in[2 * E:]
    q = query @ wq.T + bq
    k = key @ wk.T + bk
    v = value @ wv.T + bv
    q = q.reshape(B, Lq, num_heads, Dh).transpose(0, 2, 1, 3)
    k = k.reshape(B, Lk, num_heads, Dh).transpose(0, 2, 1, 3)
    v = v.reshape(B, Lk, num_heads, Dh).transpose(0, 2, 1, 3)
    s = jnp.einsum("bhqd,bhkd->bhqk", q, k) / math.sqrt(Dh)
    p = jax.nn.softmax(s, axis=-1)
    o = jnp.einsum("bhqk,bhkd->bhqd", p, v)
    o = o.transpose(0, 2, 1, 3).reshape(B, Lq, E)
    return o @ w_out.T + b_out


def init_params(key, embed_dim):
    """Parameter shapes match nn.MultiheadAttention's packed parameters."""
    k1, k2, k3, k4 = jax.random.split(key, 4)
    limit_in = math.sqrt(6.0 / (embed_dim + 3 * embed_dim))
    w_in = jax.random.uniform(k1, (3 * embed_dim, embed_dim), jnp.float32,
                              -limit_in, limit_in)
    limit_out = math.sqrt(6.0 / (2 * embed_dim))
    w_out = jax.random.uniform(k2, (embed_dim, embed_dim), jnp.float32,
                               -limit_out, limit_out)
    # nn.MultiheadAttention zero-inits biases; use small random biases here so the
    # bias path is actually exercised by the numerical check.
    b_in = 0.1 * jax.random.normal(k3, (3 * embed_dim,), jnp.float32)
    b_out = 0.1 * jax.random.normal(k4, (embed_dim,), jnp.float32)
    return (w_in, b_in, w_out, b_out)


if __name__ == "__main__":
    B, Lq, Lk, E, H = 2, 16, 8, 32, 8

    root = jax.random.PRNGKey(0)
    kq, kk, kv, kp = jax.random.split(root, 4)
    query = jax.random.normal(kq, (B, Lq, E), jnp.float32)
    key_ = jax.random.normal(kk, (B, Lk, E), jnp.float32)
    value = jax.random.normal(kv, (B, Lk, E), jnp.float32)
    params = init_params(kp, E)

    ref = _reference_mha(query, key_, value, params, H)

    # Default: one batch element / full Lq per grid step -> grid (B, 1), both "parallel".
    attn_out, attn_weights = cross_attention_block(
        query, key_, value, params, num_heads=H, need_weights=False)
    attn_out = jax.block_until_ready(attn_out)
    np.testing.assert_allclose(np.asarray(attn_out), np.asarray(ref),
                               rtol=2e-3, atol=2e-3)
    assert attn_weights is None

    # Lq-tiled variant (block_q < Lq): exercises the second "parallel" grid axis, which is
    # how a B == 1 call keeps both v7x TensorCores busy.
    attn_out_t, _ = cross_attention_block(
        query, key_, value, params, num_heads=H, need_weights=False, block_q=8)
    attn_out_t = jax.block_until_ready(attn_out_t)
    np.testing.assert_allclose(np.asarray(attn_out_t), np.asarray(ref),
                               rtol=2e-3, atol=2e-3)

    print("KERNEL_OK")
</pallas_src>

<mosaic_0001>
module attributes {stable_mosaic.version = 11 : i64} {
  func.func @_mha_kernel(%arg0: i32, %arg1: i32, %arg2: memref<1x16x32xf32, #tpu.memory_space<vmem>>, %arg3: memref<1x8x32xf32, #tpu.memory_space<vmem>>, %arg4: memref<1x8x32xf32, #tpu.memory_space<vmem>>, %arg5: memref<3x32x32xf32, #tpu.memory_space<vmem>>, %arg6: memref<3x1x32xf32, #tpu.memory_space<vmem>>, %arg7: memref<32x32xf32, #tpu.memory_space<vmem>>, %arg8: memref<1x32xf32, #tpu.memory_space<vmem>>, %arg9: memref<1x16x32xf32, #tpu.memory_space<vmem>>, %arg10: memref<16x32xf32, #tpu.memory_space<vmem>>, %arg11: memref<8x32xf32, #tpu.memory_space<vmem>>, %arg12: memref<8x32xf32, #tpu.memory_space<vmem>>, %arg13: memref<16x32xf32, #tpu.memory_space<vmem>>) attributes {dimension_semantics = [#tpu.dimension_semantics<parallel>, #tpu.dimension_semantics<parallel>], iteration_bounds = array<i64: 2, 1>, scalar_prefetch = 0 : i64, scratch_operands = 4 : i64, tpu.core_type = #tpu.core_type<tc>, window_params = [{transform_indices = @transform_0, window_bounds = array<i64: 1, 16, 32>}, {transform_indices = @transform_1, window_bounds = array<i64: 1, 8, 32>}, {transform_indices = @transform_2, window_bounds = array<i64: 1, 8, 32>}, {pipeline_mode = #tpu.pipeline_mode<synchronous>, transform_indices = @transform_3, window_bounds = array<i64: 3, 32, 32>}, {pipeline_mode = #tpu.pipeline_mode<synchronous>, transform_indices = @transform_4, window_bounds = array<i64: 3, 1, 32>}, {pipeline_mode = #tpu.pipeline_mode<synchronous>, transform_indices = @transform_5, window_bounds = array<i64: 32, 32>}, {pipeline_mode = #tpu.pipeline_mode<synchronous>, transform_indices = @transform_6, window_bounds = array<i64: 1, 32>}, {transform_indices = @transform_7, window_bounds = array<i64: 1, 16, 32>}]} {
    %c0 = arith.constant 0 : index
    %c0_0 = arith.constant 0 : index
    %c0_1 = arith.constant 0 : index
    %0 = vector.load %arg2[%c0, %c0_0, %c0_1] : memref<1x16x32xf32, #tpu.memory_space<vmem>>, vector<1x16x32xf32>
    %1 = vector.shape_cast %0 : vector<1x16x32xf32> to vector<16x32xf32>
    %c0_2 = arith.constant 0 : index
    %c0_3 = arith.constant 0 : index
    %c0_4 = arith.constant 0 : index
    %2 = vector.load %arg5[%c0_2, %c0_3, %c0_4] : memref<3x32x32xf32, #tpu.memory_space<vmem>>, vector<1x32x32xf32>
    %3 = vector.shape_cast %2 : vector<1x32x32xf32> to vector<32x32xf32>
    %cst = arith.constant dense<0.000000e+00> : vector<16x32xf32>
    %4 = tpu.matmul %1, %3, %cst {dimension_numbers = #tpu.dot_dimension_numbers<[1], [0], [0], [1], [0, 0, 1, 1], [], []>} : vector<16x32xf32>, vector<32x32xf32>, vector<16x32xf32> -> vector<16x32xf32>
    %c0_5 = arith.constant 0 : index
    %c0_6 = arith.constant 0 : index
    %c0_7 = arith.constant 0 : index
    %5 = vector.load %arg6[%c0_5, %c0_6, %c0_7] : memref<3x1x32xf32, #tpu.memory_space<vmem>>, vector<1x1x32xf32>
    %6 = vector.shape_cast %5 : vector<1x1x32xf32> to vector<1x32xf32>
    %7 = vector.broadcast %6 : vector<1x32xf32> to vector<16x32xf32>
    %8 = arith.addf %4, %7 : vector<16x32xf32>
    %c0_8 = arith.constant 0 : index
    %c0_9 = arith.constant 0 : index
    %9 = vector.load %arg10[%c0_8, %c0_9] : memref<16x32xf32, #tpu.memory_space<vmem>>, vector<16x32xf32>
    tpu.vector_store %arg10[%c0_8, %c0_9], %8 {strides = array<i32>} : memref<16x32xf32, #tpu.memory_space<vmem>>, vector<16x32xf32>,
    %c0_10 = arith.constant 0 : index
    %c0_11 = arith.constant 0 : index
    %c0_12 = arith.constant 0 : index
    %10 = vector.load %arg3[%c0_10, %c0_11, %c0_12] : memref<1x8x32xf32, #tpu.memory_space<vmem>>, vector<1x8x32xf32>
    %11 = vector.shape_cast %10 : vector<1x8x32xf32> to vector<8x32xf32>
    %c1 = arith.constant 1 : index
    %c0_13 = arith.constant 0 : index
    %c0_14 = arith.constant 0 : index
    %12 = vector.load %arg5[%c1, %c0_13, %c0_14] : memref<3x32x32xf32, #tpu.memory_space<vmem>>, vector<1x32x32xf32>
    %13 = vector.shape_cast %12 : vector<1x32x32xf32> to vector<32x32xf32>
    %cst_15 = arith.constant dense<0.000000e+00> : vector<8x32xf32>
    %14 = tpu.matmul %11, %13, %cst_15 {dimension_numbers = #tpu.dot_dimension_numbers<[1], [0], [0], [1], [0, 0, 1, 1], [], []>} : vector<8x32xf32>, vector<32x32xf32>, vector<8x32xf32> -> vector<8x32xf32>
    %c1_16 = arith.constant 1 : index
    %c0_17 = arith.constant 0 : index
    %c0_18 = arith.constant 0 : index
    %15 = vector.load %arg6[%c1_16, %c0_17, %c0_18] : memref<3x1x32xf32, #tpu.memory_space<vmem>>, vector<1x1x32xf32>
    %16 = vector.shape_cast %15 : vector<1x1x32xf32> to vector<1x32xf32>
    %17 = vector.broadcast %16 : vector<1x32xf32> to vector<8x32xf32>
    %18 = arith.addf %14, %17 : vector<8x32xf32>
    %c0_19 = arith.constant 0 : index
    %c0_20 = arith.constant 0 : index
    %19 = vector.load %arg11[%c0_19, %c0_20] : memref<8x32xf32, #tpu.memory_space<vmem>>, vector<8x32xf32>
    tpu.vector_store %arg11[%c0_19, %c0_20], %18 {strides = array<i32>} : memref<8x32xf32, #tpu.memory_space<vmem>>, vector<8x32xf32>,
    %c0_21 = arith.constant 0 : index
    %c0_22 = arith.constant 0 : index
    %c0_23 = arith.constant 0 : index
    %20 = vector.load %arg4[%c0_21, %c0_22, %c0_23] : memref<1x8x32xf32, #tpu.memory_space<vmem>>, vector<1x8x32xf32>
    %21 = vector.shape_cast %20 : vector<1x8x32xf32> to vector<8x32xf32>
    %c2 = arith.constant 2 : index
    %c0_24 = arith.constant 0 : index
    %c0_25 = arith.constant 0 : index
    %22 = vector.load %arg5[%c2, %c0_24, %c0_25] : memref<3x32x32xf32, #tpu.memory_space<vmem>>, vector<1x32x32xf32>
    %23 = vector.shape_cast %22 : vector<1x32x32xf32> to vector<32x32xf32>
    %cst_26 = arith.constant dense<0.000000e+00> : vector<8x32xf32>
    %24 = tpu.matmul %21, %23, %cst_26 {dimension_numbers = #tpu.dot_dimension_numbers<[1], [0], [0], [1], [0, 0, 1, 1], [], []>} : vector<8x32xf32>, vector<32x32xf32>, vector<8x32xf32> -> vector<8x32xf32>
    %c2_27 = arith.constant 2 : index
    %c0_28 = arith.constant 0 : index
    %c0_29 = arith.constant 0 : index
    %25 = vector.load %arg6[%c2_27, %c0_28, %c0_29] : memref<3x1x32xf32, #tpu.memory_space<vmem>>, vector<1x1x32xf32>
    %26 = vector.shape_cast %25 : vector<1x1x32xf32> to vector<1x32xf32>
    %27 = vector.broadcast %26 : vector<1x32xf32> to vector<8x32xf32>
    %28 = arith.addf %24, %27 : vector<8x32xf32>
    %c0_30 = arith.constant 0 : index
    %c0_31 = arith.constant 0 : index
    %29 = vector.load %arg12[%c0_30, %c0_31] : memref<8x32xf32, #tpu.memory_space<vmem>>, vector<8x32xf32>
    tpu.vector_store %arg12[%c0_30, %c0_31], %28 {strides = array<i32>} : memref<8x32xf32, #tpu.memory_space<vmem>>, vector<8x32xf32>,
    %c0_32 = arith.constant 0 : index
    %c0_33 = arith.constant 0 : index
    %30 = vector.load %arg10[%c0_32, %c0_33] : memref<16x32xf32, #tpu.memory_space<vmem>>, vector<16x4xf32>
    %c0_34 = arith.constant 0 : index
    %c0_35 = arith.constant 0 : index
    %31 = vector.load %arg11[%c0_34, %c0_35] : memref<8x32xf32, #tpu.memory_space<vmem>>, vector<8x4xf32>
    %cst_36 = arith.constant dense<0.000000e+00> : vector<16x8xf32>
    %32 = tpu.matmul %30, %31, %cst_36 {dimension_numbers = #tpu.dot_dimension_numbers<[1], [1], [0], [0], [0, 0, 1, 0], [], []>} : vector<16x4xf32>, vector<8x4xf32>, vector<16x8xf32> -> vector<16x8xf32>
    %cst_37 = arith.constant dense<0xFF800000> : vector<16xf32>
    %33 = vector.multi_reduction <maximumf>, %32, %cst_37 [1] : vector<16x8xf32> to vector<16xf32>
    %34 = vector.shape_cast %33 : vector<16xf32> to vector<16x1xf32>
    %35 = vector.broadcast %34 : vector<16x1xf32> to vector<16x8xf32>
    %36 = arith.subf %32, %35 : vector<16x8xf32>
    %37 = math.exp %36 : vector<16x8xf32>
    %cst_38 = arith.constant dense<0.000000e+00> : vector<16xf32>
    %38 = vector.multi_reduction <add>, %37, %cst_38 [1] : vector<16x8xf32> to vector<16xf32>
    %39 = vector.shape_cast %38 : vector<16xf32> to vector<16x1xf32>
    %40 = tpu.reciprocal %39 {approx = true} : vector<16x1xf32> -> vector<16x1xf32>
    %41 = vector.broadcast %40 : vector<16x1xf32> to vector<16x8xf32>
    %42 = arith.mulf %37, %41 : vector<16x8xf32>
    %c0_39 = arith.constant 0 : index
    %c0_40 = arith.constant 0 : index
    %43 = vector.load %arg12[%c0_39, %c0_40] : memref<8x32xf32, #tpu.memory_space<vmem>>, vector<8x4xf32>
    %cst_41 = arith.constant dense<0.000000e+00> : vector<16x4xf32>
    %44 = tpu.matmul %42, %43, %cst_41 {dimension_numbers = #tpu.dot_dimension_numbers<[1], [0], [0], [1], [0, 0, 1, 1], [], []>} : vector<16x8xf32>, vector<8x4xf32>, vector<16x4xf32> -> vector<16x4xf32>
    %c0_42 = arith.constant 0 : index
    %c0_43 = arith.constant 0 : index
    %45 = vector.load %arg13[%c0_42, %c0_43] : memref<16x32xf32, #tpu.memory_space<vmem>>, vector<16x4xf32>
    tpu.vector_store %arg13[%c0_42, %c0_43], %44 {strides = array<i32>} : memref<16x32xf32, #tpu.memory_space<vmem>>, vector<16x4xf32>,
    %c0_44 = arith.constant 0 : index
    %c4 = arith.constant 4 : index
    %46 = vector.load %arg10[%c0_44, %c4] : memref<16x32xf32, #tpu.memory_space<vmem>>, vector<16x4xf32>
    %c0_45 = arith.constant 0 : index
    %c4_46 = arith.constant 4 : index
    %47 = vector.load %arg11[%c0_45, %c4_46] : memref<8x32xf32, #tpu.memory_space<vmem>>, vector<8x4xf32>
    %cst_47 = arith.constant dense<0.000000e+00> : vector<16x8xf32>
    %48 = tpu.matmul %46, %47, %cst_47 {dimension_numbers = #tpu.dot_dimension_numbers<[1], [1], [0], [0], [0, 0, 1, 0], [], []>} : vector<16x4xf32>, vector<8x4xf32>, vector<16x8xf32> -> vector<16x8xf32>
    %cst_48 = arith.constant dense<0xFF800000> : vector<16xf32>
    %49 = vector.multi_reduction <maximumf>, %48, %cst_48 [1] : vector<16x8xf32> to vector<16xf32>
    %50 = vector.shape_cast %49 : vector<16xf32> to vector<16x1xf32>
    %51 = vector.broadcast %50 : vector<16x1xf32> to vector<16x8xf32>
    %52 = arith.subf %48, %51 : vector<16x8xf32>
    %53 = math.exp %52 : vector<16x8xf32>
    %cst_49 = arith.constant dense<0.000000e+00> : vector<16xf32>
    %54 = vector.multi_reduction <add>, %53, %cst_49 [1] : vector<16x8xf32> to vector<16xf32>
    %55 = vector.shape_cast %54 : vector<16xf32> to vector<16x1xf32>
    %56 = tpu.reciprocal %55 {approx = true} : vector<16x1xf32> -> vector<16x1xf32>
    %57 = vector.broadcast %56 : vector<16x1xf32> to vector<16x8xf32>
    %58 = arith.mulf %53, %57 : vector<16x8xf32>
    %c0_50 = arith.constant 0 : index
    %c4_51 = arith.constant 4 : index
    %59 = vector.load %arg12[%c0_50, %c4_51] : memref<8x32xf32, #tpu.memory_space<vmem>>, vector<8x4xf32>
    %cst_52 = arith.constant dense<0.000000e+00> : vector<16x4xf32>
    %60 = tpu.matmul %58, %59, %cst_52 {dimension_numbers = #tpu.dot_dimension_numbers<[1], [0], [0], [1], [0, 0, 1, 1], [], []>} : vector<16x8xf32>, vector<8x4xf32>, vector<16x4xf32> -> vector<16x4xf32>
    %c0_53 = arith.constant 0 : index
    %c4_54 = arith.constant 4 : index
    %61 = vector.load %arg13[%c0_53, %c4_54] : memref<16x32xf32, #tpu.memory_space<vmem>>, vector<16x4xf32>
    tpu.vector_store %arg13[%c0_53, %c4_54], %60 {strides = array<i32>} : memref<16x32xf32, #tpu.memory_space<vmem>>, vector<16x4xf32>,
    %c0_55 = arith.constant 0 : index
    %c8 = arith.constant 8 : index
    %62 = vector.load %arg10[%c0_55, %c8] : memref<16x32xf32, #tpu.memory_space<vmem>>, vector<16x4xf32>
    %c0_56 = arith.constant 0 : index
    %c8_57 = arith.constant 8 : index
    %63 = vector.load %arg11[%c0_56, %c8_57] : memref<8x32xf32, #tpu.memory_space<vmem>>, vector<8x4xf32>
    %cst_58 = arith.constant dense<0.000000e+00> : vector<16x8xf32>
    %64 = tpu.matmul %62, %63, %cst_58 {dimension_numbers = #tpu.dot_dimension_numbers<[1], [1], [0], [0], [0, 0, 1, 0], [], []>} : vector<16x4xf32>, vector<8x4xf32>, vector<16x8xf32> -> vector<16x8xf32>
    %cst_59 = arith.constant dense<0xFF800000> : vector<16xf32>
    %65 = vector.multi_reduction <maximumf>, %64, %cst_59 [1] : vector<16x8xf32> to vector<16xf32>
    %66 = vector.shape_cast %65 : vector<16xf32> to vector<16x1xf32>
    %67 = vector.broadcast %66 : vector<16x1xf32> to vector<16x8xf32>
    %68 = arith.subf %64, %67 : vector<16x8xf32>
    %69 = math.exp %68 : vector<16x8xf32>
    %cst_60 = arith.constant dense<0.000000e+00> : vector<16xf32>
    %70 = vector.multi_reduction <add>, %69, %cst_60 [1] : vector<16x8xf32> to vector<16xf32>
    %71 = vector.shape_cast %70 : vector<16xf32> to vector<16x1xf32>
    %72 = tpu.reciprocal %71 {approx = true} : vector<16x1xf32> -> vector<16x1xf32>
    %73 = vector.broadcast %72 : vector<16x1xf32> to vector<16x8xf32>
    %74 = arith.mulf %69, %73 : vector<16x8xf32>
    %c0_61 = arith.constant 0 : index
    %c8_62 = arith.constant 8 : index
    %75 = vector.load %arg12[%c0_61, %c8_62] : memref<8x32xf32, #tpu.memory_space<vmem>>, vector<8x4xf32>
    %cst_63 = arith.constant dense<0.000000e+00> : vector<16x4xf32>
    %76 = tpu.matmul %74, %75, %cst_63 {dimension_numbers = #tpu.dot_dimension_numbers<[1], [0], [0], [1], [0, 0, 1, 1], [], []>} : vector<16x8xf32>, vector<8x4xf32>, vector<16x4xf32> -> vector<16x4xf32>
    %c0_64 = arith.constant 0 : index
    %c8_65 = arith.constant 8 : index
    %77 = vector.load %arg13[%c0_64, %c8_65] : memref<16x32xf32, #tpu.memory_space<vmem>>, vector<16x4xf32>
    tpu.vector_store %arg13[%c0_64, %c8_65], %76 {strides = array<i32>} : memref<16x32xf32, #tpu.memory_space<vmem>>, vector<16x4xf32>,
    %c0_66 = arith.constant 0 : index
    %c12 = arith.constant 12 : index
    %78 = vector.load %arg10[%c0_66, %c12] : memref<16x32xf32, #tpu.memory_space<vmem>>, vector<16x4xf32>
    %c0_67 = arith.constant 0 : index
    %c12_68 = arith.constant 12 : index
    %79 = vector.load %arg11[%c0_67, %c12_68] : memref<8x32xf32, #tpu.memory_space<vmem>>, vector<8x4xf32>
    %cst_69 = arith.constant dense<0.000000e+00> : vector<16x8xf32>
    %80 = tpu.matmul %78, %79, %cst_69 {dimension_numbers = #tpu.dot_dimension_numbers<[1], [1], [0], [0], [0, 0, 1, 0], [], []>} : vector<16x4xf32>, vector<8x4xf32>, vector<16x8xf32> -> vector<16x8xf32>
    %cst_70 = arith.constant dense<0xFF800000> : vector<16xf32>
    %81 = vector.multi_reduction <maximumf>, %80, %cst_70 [1] : vector<16x8xf32> to vector<16xf32>
    %82 = vector.shape_cast %81 : vector<16xf32> to vector<16x1xf32>
    %83 = vector.broadcast %82 : vector<16x1xf32> to vector<16x8xf32>
    %84 = arith.subf %80, %83 : vector<16x8xf32>
    %85 = math.exp %84 : vector<16x8xf32>
    %cst_71 = arith.constant dense<0.000000e+00> : vector<16xf32>
    %86 = vector.multi_reduction <add>, %85, %cst_71 [1] : vector<16x8xf32> to vector<16xf32>
    %87 = vector.shape_cast %86 : vector<16xf32> to vector<16x1xf32>
    %88 = tpu.reciprocal %87 {approx = true} : vector<16x1xf32> -> vector<16x1xf32>
    %89 = vector.broadcast %88 : vector<16x1xf32> to vector<16x8xf32>
    %90 = arith.mulf %85, %89 : vector<16x8xf32>
    %c0_72 = arith.constant 0 : index
    %c12_73 = arith.constant 12 : index
    %91 = vector.load %arg12[%c0_72, %c12_73] : memref<8x32xf32, #tpu.memory_space<vmem>>, vector<8x4xf32>
    %cst_74 = arith.constant dense<0.000000e+00> : vector<16x4xf32>
    %92 = tpu.matmul %90, %91, %cst_74 {dimension_numbers = #tpu.dot_dimension_numbers<[1], [0], [0], [1], [0, 0, 1, 1], [], []>} : vector<16x8xf32>, vector<8x4xf32>, vector<16x4xf32> -> vector<16x4xf32>
    %c0_75 = arith.constant 0 : index
    %c12_76 = arith.constant 12 : index
    %93 = vector.load %arg13[%c0_75, %c12_76] : memref<16x32xf32, #tpu.memory_space<vmem>>, vector<16x4xf32>
    tpu.vector_store %arg13[%c0_75, %c12_76], %92 {strides = array<i32>} : memref<16x32xf32, #tpu.memory_space<vmem>>, vector<16x4xf32>,
    %c0_77 = arith.constant 0 : index
    %c16 = arith.constant 16 : index
    %94 = vector.load %arg10[%c0_77, %c16] : memref<16x32xf32, #tpu.memory_space<vmem>>, vector<16x4xf32>
    %c0_78 = arith.constant 0 : index
    %c16_79 = arith.constant 16 : index
    %95 = vector.load %arg11[%c0_78, %c16_79] : memref<8x32xf32, #tpu.memory_space<vmem>>, vector<8x4xf32>
    %cst_80 = arith.constant dense<0.000000e+00> : vector<16x8xf32>
    %96 = tpu.matmul %94, %95, %cst_80 {dimension_numbers = #tpu.dot_dimension_numbers<[1], [1], [0], [0], [0, 0, 1, 0], [], []>} : vector<16x4xf32>, vector<8x4xf32>, vector<16x8xf32> -> vector<16x8xf32>
    %cst_81 = arith.constant dense<0xFF800000> : vector<16xf32>
    %97 = vector.multi_reduction <maximumf>, %96, %cst_81 [1] : vector<16x8xf32> to vector<16xf32>
    %98 = vector.shape_cast %97 : vector<16xf32> to vector<16x1xf32>
    %99 = vector.broadcast %98 : vector<16x1xf32> to vector<16x8xf32>
    %100 = arith.subf %96, %99 : vector<16x8xf32>
    %101 = math.exp %100 : vector<16x8xf32>
    %cst_82 = arith.constant dense<0.000000e+00> : vector<16xf32>
    %102 = vector.multi_reduction <add>, %101, %cst_82 [1] : vector<16x8xf32> to vector<16xf32>
    %103 = vector.shape_cast %102 : vector<16xf32> to vector<16x1xf32>
    %104 = tpu.reciprocal %103 {approx = true} : vector<16x1xf32> -> vector<16x1xf32>
    %105 = vector.broadcast %104 : vector<16x1xf32> to vector<16x8xf32>
    %106 = arith.mulf %101, %105 : vector<16x8xf32>
    %c0_83 = arith.constant 0 : index
    %c16_84 = arith.constant 16 : index
    %107 = vector.load %arg12[%c0_83, %c16_84] : memref<8x32xf32, #tpu.memory_space<vmem>>, vector<8x4xf32>
    %cst_85 = arith.constant dense<0.000000e+00> : vector<16x4xf32>
    %108 = tpu.matmul %106, %107, %cst_85 {dimension_numbers = #tpu.dot_dimension_numbers<[1], [0], [0], [1], [0, 0, 1, 1], [], []>} : vector<16x8xf32>, vector<8x4xf32>, vector<16x4xf32> -> vector<16x4xf32>
    %c0_86 = arith.constant 0 : index
    %c16_87 = arith.constant 16 : index
    %109 = vector.load %arg13[%c0_86, %c16_87] : memref<16x32xf32, #tpu.memory_space<vmem>>, vector<16x4xf32>
    tpu.vector_store %arg13[%c0_86, %c16_87], %108 {strides = array<i32>} : memref<16x32xf32, #tpu.memory_space<vmem>>, vector<16x4xf32>,
    %c0_88 = arith.constant 0 : index
    %c20 = arith.constant 20 : index
    %110 = vector.load %arg10[%c0_88, %c20] : memref<16x32xf32, #tpu.memory_space<vmem>>, vector<16x4xf32>
    %c0_89 = arith.constant 0 : index
    %c20_90 = arith.constant 20 : index
    %111 = vector.load %arg11[%c0_89, %c20_90] : memref<8x32xf32, #tpu.memory_space<vmem>>, vector<8x4xf32>
    %cst_91 = arith.constant dense<0.000000e+00> : vector<16x8xf32>
    %112 = tpu.matmul %110, %111, %cst_91 {dimension_numbers = #tpu.dot_dimension_numbers<[1], [1], [0], [0], [0, 0, 1, 0], [], []>} : vector<16x4xf32>, vector<8x4xf32>, vector<16x8xf32> -> vector<16x8xf32>
    %cst_92 = arith.constant dense<0xFF800000> : vector<16xf32>
    %113 = vector.multi_reduction <maximumf>, %112, %cst_92 [1] : vector<16x8xf32> to vector<16xf32>
    %114 = vector.shape_cast %113 : vector<16xf32> to vector<16x1xf32>
    %115 = vector.broadcast %114 : vector<16x1xf32> to vector<16x8xf32>
    %116 = arith.subf %112, %115 : vector<16x8xf32>
    %117 = math.exp %116 : vector<16x8xf32>
    %cst_93 = arith.constant dense<0.000000e+00> : vector<16xf32>
    %118 = vector.multi_reduction <add>, %117, %cst_93 [1] : vector<16x8xf32> to vector<16xf32>
    %119 = vector.shape_cast %118 : vector<16xf32> to vector<16x1xf32>
    %120 = tpu.reciprocal %119 {approx = true} : vector<16x1xf32> -> vector<16x1xf32>
    %121 = vector.broadcast %120 : vector<16x1xf32> to vector<16x8xf32>
    %122 = arith.mulf %117, %121 : vector<16x8xf32>
    %c0_94 = arith.constant 0 : index
    %c20_95 = arith.constant 20 : index
    %123 = vector.load %arg12[%c0_94, %c20_95] : memref<8x32xf32, #tpu.memory_space<vmem>>, vector<8x4xf32>
    %cst_96 = arith.constant dense<0.000000e+00> : vector<16x4xf32>
    %124 = tpu.matmul %122, %123, %cst_96 {dimension_numbers = #tpu.dot_dimension_numbers<[1], [0], [0], [1], [0, 0, 1, 1], [], []>} : vector<16x8xf32>, vector<8x4xf32>, vector<16x4xf32> -> vector<16x4xf32>
    %c0_97 = arith.constant 0 : index
    %c20_98 = arith.constant 20 : index
    %125 = vector.load %arg13[%c0_97, %c20_98] : memref<16x32xf32, #tpu.memory_space<vmem>>, vector<16x4xf32>
    tpu.vector_store %arg13[%c0_97, %c20_98], %124 {strides = array<i32>} : memref<16x32xf32, #tpu.memory_space<vmem>>, vector<16x4xf32>,
    %c0_99 = arith.constant 0 : index
    %c24 = arith.constant 24 : index
    %126 = vector.load %arg10[%c0_99, %c24] : memref<16x32xf32, #tpu.memory_space<vmem>>, vector<16x4xf32>
    %c0_100 = arith.constant 0 : index
    %c24_101 = arith.constant 24 : index
    %127 = vector.load %arg11[%c0_100, %c24_101] : memref<8x32xf32, #tpu.memory_space<vmem>>, vector<8x4xf32>
    %cst_102 = arith.constant dense<0.000000e+00> : vector<16x8xf32>
    %128 = tpu.matmul %126, %127, %cst_102 {dimension_numbers = #tpu.dot_dimension_numbers<[1], [1], [0], [0], [0, 0, 1, 0], [], []>} : vector<16x4xf32>, vector<8x4xf32>, vector<16x8xf32> -> vector<16x8xf32>
    %cst_103 = arith.constant dense<0xFF800000> : vector<16xf32>
    %129 = vector.multi_reduction <maximumf>, %128, %cst_103 [1] : vector<16x8xf32> to vector<16xf32>
    %130 = vector.shape_cast %129 : vector<16xf32> to vector<16x1xf32>
    %131 = vector.broadcast %130 : vector<16x1xf32> to vector<16x8xf32>
    %132 = arith.subf %128, %131 : vector<16x8xf32>
    %133 = math.exp %132 : vector<16x8xf32>
    %cst_104 = arith.constant dense<0.000000e+00> : vector<16xf32>
    %134 = vector.multi_reduction <add>, %133, %cst_104 [1] : vector<16x8xf32> to vector<16xf32>
    %135 = vector.shape_cast %134 : vector<16xf32> to vector<16x1xf32>
    %136 = tpu.reciprocal %135 {approx = true} : vector<16x1xf32> -> vector<16x1xf32>
    %137 = vector.broadcast %136 : vector<16x1xf32> to vector<16x8xf32>
    %138 = arith.mulf %133, %137 : vector<16x8xf32>
    %c0_105 = arith.constant 0 : index
    %c24_106 = arith.constant 24 : index
    %139 = vector.load %arg12[%c0_105, %c24_106] : memref<8x32xf32, #tpu.memory_space<vmem>>, vector<8x4xf32>
    %cst_107 = arith.constant dense<0.000000e+00> : vector<16x4xf32>
    %140 = tpu.matmul %138, %139, %cst_107 {dimension_numbers = #tpu.dot_dimension_numbers<[1], [0], [0], [1], [0, 0, 1, 1], [], []>} : vector<16x8xf32>, vector<8x4xf32>, vector<16x4xf32> -> vector<16x4xf32>
    %c0_108 = arith.constant 0 : index
    %c24_109 = arith.constant 24 : index
    %141 = vector.load %arg13[%c0_108, %c24_109] : memref<16x32xf32, #tpu.memory_space<vmem>>, vector<16x4xf32>
    tpu.vector_store %arg13[%c0_108, %c24_109], %140 {strides = array<i32>} : memref<16x32xf32, #tpu.memory_space<vmem>>, vector<16x4xf32>,
    %c0_110 = arith.constant 0 : index
    %c28 = arith.constant 28 : index
    %142 = vector.load %arg10[%c0_110, %c28] : memref<16x32xf32, #tpu.memory_space<vmem>>, vector<16x4xf32>
    %c0_111 = arith.constant 0 : index
    %c28_112 = arith.constant 28 : index
    %143 = vector.load %arg11[%c0_111, %c28_112] : memref<8x32xf32, #tpu.memory_space<vmem>>, vector<8x4xf32>
    %cst_113 = arith.constant dense<0.000000e+00> : vector<16x8xf32>
    %144 = tpu.matmul %142, %143, %cst_113 {dimension_numbers = #tpu.dot_dimension_numbers<[1], [1], [0], [0], [0, 0, 1, 0], [], []>} : vector<16x4xf32>, vector<8x4xf32>, vector<16x8xf32> -> vector<16x8xf32>
    %cst_114 = arith.constant dense<0xFF800000> : vector<16xf32>
    %145 = vector.multi_reduction <maximumf>, %144, %cst_114 [1] : vector<16x8xf32> to vector<16xf32>
    %146 = vector.shape_cast %145 : vector<16xf32> to vector<16x1xf32>
    %147 = vector.broadcast %146 : vector<16x1xf32> to vector<16x8xf32>
    %148 = arith.subf %144, %147 : vector<16x8xf32>
    %149 = math.exp %148 : vector<16x8xf32>
    %cst_115 = arith.constant dense<0.000000e+00> : vector<16xf32>
    %150 = vector.multi_reduction <add>, %149, %cst_115 [1] : vector<16x8xf32> to vector<16xf32>
    %151 = vector.shape_cast %150 : vector<16xf32> to vector<16x1xf32>
    %152 = tpu.reciprocal %151 {approx = true} : vector<16x1xf32> -> vector<16x1xf32>
    %153 = vector.broadcast %152 : vector<16x1xf32> to vector<16x8xf32>
    %154 = arith.mulf %149, %153 : vector<16x8xf32>
    %c0_116 = arith.constant 0 : index
    %c28_117 = arith.constant 28 : index
    %155 = vector.load %arg12[%c0_116, %c28_117] : memref<8x32xf32, #tpu.memory_space<vmem>>, vector<8x4xf32>
    %cst_118 = arith.constant dense<0.000000e+00> : vector<16x4xf32>
    %156 = tpu.matmul %154, %155, %cst_118 {dimension_numbers = #tpu.dot_dimension_numbers<[1], [0], [0], [1], [0, 0, 1, 1], [], []>} : vector<16x8xf32>, vector<8x4xf32>, vector<16x4xf32> -> vector<16x4xf32>
    %c0_119 = arith.constant 0 : index
    %c28_120 = arith.constant 28 : index
    %157 = vector.load %arg13[%c0_119, %c28_120] : memref<16x32xf32, #tpu.memory_space<vmem>>, vector<16x4xf32>
    tpu.vector_store %arg13[%c0_119, %c28_120], %156 {strides = array<i32>} : memref<16x32xf32, #tpu.memory_space<vmem>>, vector<16x4xf32>,
    %c0_121 = arith.constant 0 : index
    %c0_122 = arith.constant 0 : index
    %158 = vector.load %arg13[%c0_121, %c0_122] : memref<16x32xf32, #tpu.memory_space<vmem>>, vector<16x32xf32>
    %c0_123 = arith.constant 0 : index
    %c0_124 = arith.constant 0 : index
    %159 = vector.load %arg7[%c0_123, %c0_124] : memref<32x32xf32, #tpu.memory_space<vmem>>, vector<32x32xf32>
    %cst_125 = arith.constant dense<0.000000e+00> : vector<16x32xf32>
    %160 = tpu.matmul %158, %159, %cst_125 {dimension_numbers = #tpu.dot_dimension_numbers<[1], [0], [0], [1], [0, 0, 1, 1], [], []>} : vector<16x32xf32>, vector<32x32xf32>, vector<16x32xf32> -> vector<16x32xf32>
    %c0_126 = arith.constant 0 : index
    %c0_127 = arith.constant 0 : index
    %161 = vector.load %arg8[%c0_126, %c0_127] : memref<1x32xf32, #tpu.memory_space<vmem>>, vector<1x32xf32>
    %162 = vector.broadcast %161 : vector<1x32xf32> to vector<16x32xf32>
    %163 = arith.addf %160, %162 : vector<16x32xf32>
    %c0_128 = arith.constant 0 : index
    %c0_129 = arith.constant 0 : index
    %c0_130 = arith.constant 0 : index
    %164 = vector.load %arg9[%c0_128, %c0_129, %c0_130] : memref<1x16x32xf32, #tpu.memory_space<vmem>>, vector<1x16x32xf32>
    %165 = vector.shape_cast %164 : vector<1x16x32xf32> to vector<16x32xf32>
    %166 = vector.shape_cast %163 : vector<16x32xf32> to vector<1x16x32xf32>
    tpu.vector_store %arg9[%c0_128, %c0_129, %c0_130], %166 {strides = array<i32>} : memref<1x16x32xf32, #tpu.memory_space<vmem>>, vector<1x16x32xf32>,
    return
  }
  func.func @transform_0(%arg0: i32, %arg1: i32) -> (i32, i32, i32) {
    %c0_i32 = arith.constant 0 : i32
    %c0_i32_0 = arith.constant 0 : i32
    return %arg0, %arg1, %c0_i32 : i32, i32, i32
  }
  func.func @transform_1(%arg0: i32, %arg1: i32) -> (i32, i32, i32) {
    %c0_i32 = arith.constant 0 : i32
    %c0_i32_0 = arith.constant 0 : i32
    %c0_i32_1 = arith.constant 0 : i32
    return %arg0, %c0_i32, %c0_i32_0 : i32, i32, i32
  }
  func.func @transform_2(%arg0: i32, %arg1: i32) -> (i32, i32, i32) {
    %c0_i32 = arith.constant 0 : i32
    %c0_i32_0 = arith.constant 0 : i32
    %c0_i32_1 = arith.constant 0 : i32
    return %arg0, %c0_i32, %c0_i32_0 : i32, i32, i32
  }
  func.func @transform_3(%arg0: i32, %arg1: i32) -> (i32, i32, i32) {
    %c0_i32 = arith.constant 0 : i32
    %c0_i32_0 = arith.constant 0 : i32
    %c0_i32_1 = arith.constant 0 : i32
    %c0_i32_2 = arith.constant 0 : i32
    return %c0_i32, %c0_i32_0, %c0_i32_1 : i32, i32, i32
  }
  func.func @transform_4(%arg0: i32, %arg1: i32) -> (i32, i32, i32) {
    %c0_i32 = arith.constant 0 : i32
    %c0_i32_0 = arith.constant 0 : i32
    %c0_i32_1 = arith.constant 0 : i32
    %c0_i32_2 = arith.constant 0 : i32
    return %c0_i32, %c0_i32_0, %c0_i32_1 : i32, i32, i32
  }
  func.func @transform_5(%arg0: i32, %arg1: i32) -> (i32, i32) {
    %c0_i32 = arith.constant 0 : i32
    %c0_i32_0 = arith.constant 0 : i32
    %c0_i32_1 = arith.constant 0 : i32
    return %c0_i32, %c0_i32_0 : i32, i32
  }
  func.func @transform_6(%arg0: i32, %arg1: i32) -> (i32, i32) {
    %c0_i32 = arith.constant 0 : i32
    %c0_i32_0 = arith.constant 0 : i32
    %c0_i32_1 = arith.constant 0 : i32
    return %c0_i32, %c0_i32_0 : i32, i32
  }
  func.func @transform_7(%arg0: i32, %arg1: i32) -> (i32, i32, i32) {
    %c0_i32 = arith.constant 0 : i32
    %c0_i32_0 = arith.constant 0 : i32
    return %arg0, %arg1, %c0_i32 : i32, i32, i32
  }
}

</mosaic_0001>

<llo_original>
// kernel: tpu_custom_call.1
$region0: #{tpu_custom_call.1}
  #allocation0 [shape = 'u32[]', space=smem, size = 0x4, offset = 0x4, fixed_abs, tag = 'smem constant byte address 0x4 - core index']
  #allocation1 [shape = 'u32[144,128]{1,0:T(1,128)}', space=vmem, size = 0x12000, scoped, tag = 'internal scratch']
  #allocation2 [shape = 'f32[16,32]{1,0:T(8,128)}', space=vmem, size = 0x2000, scoped, tag = 'scratch operand']
  #allocation3 [shape = 'f32[8,32]{1,0:T(8,128)}', space=vmem, size = 0x1000, scoped, tag = 'scratch operand']
  #allocation4 [shape = 'f32[8,32]{1,0:T(8,128)}', space=vmem, size = 0x1000, scoped, tag = 'scratch operand']
  #allocation5 [shape = 'f32[16,32]{1,0:T(8,128)}', space=vmem, size = 0x2000, scoped, tag = 'scratch operand']
  %s0 = inlined_call_operand.hbm [shape: f32[2,16,32], index: 0, kind: input, shape index: {}]
  %s1 = inlined_call_operand.hbm [shape: f32[2,8,32], index: 1, kind: input, shape index: {}]
  %s2 = inlined_call_operand.hbm [shape: f32[2,8,32], index: 2, kind: input, shape index: {}]
  %s3 = inlined_call_operand.hbm [shape: f32[3,32,32], index: 3, kind: input, shape index: {}]
  %s4 = inlined_call_operand.vmem [shape: f32[3,1,32], index: 4, kind: input, shape index: {}]
  %s5 = inlined_call_operand.hbm [shape: f32[32,32], index: 5, kind: input, shape index: {}]
  %s6 = inlined_call_operand.vmem [shape: f32[1,32], index: 6, kind: input, shape index: {}]
  %s7 = inlined_call_operand.hbm [shape: f32[2,16,32], index: 7, kind: output, shape index: {}]
  %s8 = sld [smem:[#allocation0]]
  $region81: #{tpu_custom_call.1} parent=0
    _
  %s10 = ssub.s32 1, %s8
  %s11 = scalar_select 0, %s10, %s8
  $region1: #{tpu_custom_call.1} parent=0
    #allocation6 [shape = 'u8[16384]{0}', space=vmem, size = 0x4000, scoped, tag = 'input window, operand 0']
    #allocation7 [shape = 's32[2]{0}', space=sflag, size = 0x8, scoped, tag = 'scoped memory for tpu_custom_call.1']
    #allocation8 [shape = 's32[2]{0}', space=sflag, size = 0x8, scoped, tag = 'scoped memory for tpu_custom_call.1']
    #allocation9 [shape = 'u8[8192]{0}', space=vmem, size = 0x2000, scoped, tag = 'input window, operand 1']
    #allocation10 [shape = 's32[2]{0}', space=sflag, size = 0x8, scoped, tag = 'scoped memory for tpu_custom_call.1']
    #allocation11 [shape = 'u8[8192]{0}', space=vmem, size = 0x2000, scoped, tag = 'input window, operand 2']
    #allocation12 [shape = 'u8[49152]{0}', space=vmem, size = 0xc000, scoped, tag = 'input window, operand 3, single buffered']
    #allocation13 [shape = 's32[1]{0}', space=sflag, size = 0x4, scoped, tag = 'scoped memory for tpu_custom_call.1']
    #allocation14 [shape = 'u8[16384]{0}', space=vmem, size = 0x4000, scoped, tag = 'input window, operand 5, single buffered']
    #allocation15 [shape = 'u8[16384]{0}', space=vmem, size = 0x4000, scoped, tag = 'output window, operand 0']
    %12 = vsyncpa [#allocation7], 0
    %s13 = scalar_lea.sflag [#allocation7], 1
    %14 = vsyncpa %s13, 0
    %15 = vsyncpa [#allocation10], 0
    %s16 = scalar_lea.sflag [#allocation10], 1
    %17 = vsyncpa %s16, 0
    %18 = vsyncpa [#allocation13], 0
    %19 = vsyncpa [#allocation8], 0
    %s20 = scalar_lea.sflag [#allocation8], 1
    %21 = vsyncpa %s20, 0
    loop: start=0, step=1, limit=4
    $region2: #{tpu_custom_call.1} parent=1 // loop_pre_header
      _
    $region3: #{tpu_custom_call.1} parent=1 // loop_header
      %s23 = sphi 0, %s27
      %p24 = scmp.ge.s32.totalorder %s23, 4
      %s30 = sphi 0, %s42
      %s31 = sphi 0, %s38
      %s32 = sphi 0, %s30
      %s33 = sphi 0, %s31
      %s34 = sphi 0, %s32
      %s35 = sphi 0, %s33
      %s47 = sphi 0, %s49
      %s50 = sphi 0, %s47
      %s51 = sphi 0, %s50
      %s67 = sphi 0, %s51
      %s73 = sphi 0, %s75
      %s76 = sphi 0, %s73
      %s77 = sphi 0, %s76
      %s93 = sphi 0, %s77
      %s99 = sphi 0, %s101
      %s102 = sphi 0, %s99
      %s103 = sphi 0, %s102
      %s119 = sphi 0, %s103
      %s123 = sphi 0, %s123
      %s125 = sphi 0, %s123
      %s126 = sphi 0, %s125
      %s140 = sphi 0, %s126
      %s144 = sphi 0, %s144
      %s146 = sphi 0, %s144
      %s147 = sphi 0, %s146
      %s161 = sphi 0, %s147
      %s165 = sphi 0, %s165
      %s167 = sphi 0, %s165
      %s168 = sphi 0, %s167
      %s182 = sphi 0, %s168
      %s186 = sphi 0, %s186
      %s188 = sphi 0, %s186
      %s189 = sphi 0, %s188
      %s203 = sphi 0, %s189
      %s211 = sphi 0, %s213
      %s214 = sphi 0, %s211
      %s215 = sphi 0, %s214
      %s231 = sphi 0, %s215
    $region4: #{tpu_custom_call.1} parent=1 // loop_header_branch
      %26 = sbr.rel (%p24) target = $region8
    $region5: #{tpu_custom_call.1} parent=1 // loop_body
      %s28 = ssub.s32 %s23, 1
      %s29 = ssub.s32 %s23, 2
      %s36 = sadd.s32 1, %s31
      %p37 = scmp.ge.s32.totalorder %s36, 1
      %s38 = scalar_select %p37, 0, %s36
      %s39 = sadd.s32 1, %s30
      %s40 = scalar_select %p37, %s39, %s30
      %p41 = scmp.ge.s32.totalorder %s40, 2
      %s42 = scalar_select %p41, 0, %s40
      %s43 = ssub.s32 %s30, %s42
      %s44 = ssub.s32 %s31, %s38
      %s45 = sor.u32 %s43, %s44
      %p46 = scmp.eq.s32.totalorder %s45, 0
      %s48 = sadd.s32 %s47, 1
      %s49 = scalar_select %p46, %s47, %s48
      %p52 = pneg %p46
      %p53 = scmp.eq.s32.totalorder %s23, 1
      %p54 = por %p52, %p53
      %p55 = scmp.ne.s32.totalorder %s47, %s50
      %p56 = scmp.eq.s32.totalorder %s23, 0
      %p57 = por %p55, %p56
      %p58 = scmp.ne.s32.totalorder %s47, %s50
      %p59 = scmp.eq.s32.totalorder %s28, 1
      %p60 = por %p58, %p59
      %p61 = scmp.ne.s32.totalorder %s50, %s51
      %p62 = scmp.eq.s32.totalorder %s28, 0
      %p63 = por %p61, %p62
      %p64 = scmp.ne.s32.totalorder %s50, %s51
      %p65 = scmp.eq.s32.totalorder %s29, 1
      %p66 = por %p64, %p65
      %p68 = scmp.ne.s32.totalorder %s51, %s67
      %p69 = scmp.eq.s32.totalorder %s29, 0
      %p70 = por %p68, %p69
      %s71 = ssub.s32 %s30, %s42
      %p72 = scmp.eq.s32.totalorder %s71, 0
      %s74 = sadd.s32 %s73, 1
      %s75 = scalar_select %p72, %s73, %s74
      %p78 = pneg %p72
      %p79 = scmp.eq.s32.totalorder %s23, 1
      %p80 = por %p78, %p79
      %p81 = scmp.ne.s32.totalorder %s73, %s76
      %p82 = scmp.eq.s32.totalorder %s23, 0
      %p83 = por %p81, %p82
      %p84 = scmp.ne.s32.totalorder %s73, %s76
      %p85 = scmp.eq.s32.totalorder %s28, 1
      %p86 = por %p84, %p85
      %p87 = scmp.ne.s32.totalorder %s76, %s77
      %p88 = scmp.eq.s32.totalorder %s28, 0
      %p89 = por %p87, %p88
      %p90 = scmp.ne.s32.totalorder %s76, %s77
      %p91 = scmp.eq.s32.totalorder %s29, 1
      %p92 = por %p90, %p91
      %p94 = scmp.ne.s32.totalorder %s77, %s93
      %p95 = scmp.eq.s32.totalorder %s29, 0
      %p96 = por %p94, %p95
      %s97 = ssub.s32 %s30, %s42
      %p98 = scmp.eq.s32.totalorder %s97, 0
      %s100 = sadd.s32 %s99, 1
      %s101 = scalar_select %p98, %s99, %s100
      %p104 = pneg %p98
      %p105 = scmp.eq.s32.totalorder %s23, 1
      %p106 = por %p104, %p105
      %p107 = scmp.ne.s32.totalorder %s99, %s102
      %p108 = scmp.eq.s32.totalorder %s23, 0
      %p109 = por %p107, %p108
      %p110 = scmp.ne.s32.totalorder %s99, %s102
      %p111 = scmp.eq.s32.totalorder %s28, 1
      %p112 = por %p110, %p111
      %p113 = scmp.ne.s32.totalorder %s102, %s103
      %p114 = scmp.eq.s32.totalorder %s28, 0
      %p115 = por %p113, %p114
      %p116 = scmp.ne.s32.totalorder %s102, %s103
      %p117 = scmp.eq.s32.totalorder %s29, 1
      %p118 = por %p116, %p117
      %p120 = scmp.ne.s32.totalorder %s103, %s119
      %p121 = scmp.eq.s32.totalorder %s29, 0
      %p122 = por %p120, %p121
      %s124 = sadd.s32 %s123, 1
      %p127 = scmp.eq.s32.totalorder %s23, 1
      %p128 = scmp.ne.s32.totalorder %s123, %s125
      %p129 = scmp.eq.s32.totalorder %s23, 0
      %p130 = por %p128, %p129
      %p131 = scmp.ne.s32.totalorder %s123, %s125
      %p132 = scmp.eq.s32.totalorder %s28, 1
      %p133 = por %p131, %p132
      %p134 = scmp.ne.s32.totalorder %s125, %s126
      %p135 = scmp.eq.s32.totalorder %s28, 0
      %p136 = por %p134, %p135
      %p137 = scmp.ne.s32.totalorder %s125, %s126
      %p138 = scmp.eq.s32.totalorder %s29, 1
      %p139 = por %p137, %p138
      %p141 = scmp.ne.s32.totalorder %s126, %s140
      %p142 = scmp.eq.s32.totalorder %s29, 0
      %p143 = por %p141, %p142
      %s145 = sadd.s32 %s144, 1
      %p148 = scmp.eq.s32.totalorder %s23, 1
      %p149 = scmp.ne.s32.totalorder %s144, %s146
      %p150 = scmp.eq.s32.totalorder %s23, 0
      %p151 = por %p149, %p150
      %p152 = scmp.ne.s32.totalorder %s144, %s146
      %p153 = scmp.eq.s32.totalorder %s28, 1
      %p154 = por %p152, %p153
      %p155 = scmp.ne.s32.totalorder %s146, %s147
      %p156 = scmp.eq.s32.totalorder %s28, 0
      %p157 = por %p155, %p156
      %p158 = scmp.ne.s32.totalorder %s146, %s147
      %p159 = scmp.eq.s32.totalorder %s29, 1
      %p160 = por %p158, %p159
      %p162 = scmp.ne.s32.totalorder %s147, %s161
      %p163 = scmp.eq.s32.totalorder %s29, 0
      %p164 = por %p162, %p163
      %s166 = sadd.s32 %s165, 1
      %p169 = scmp.eq.s32.totalorder %s23, 1
      %p170 = scmp.ne.s32.totalorder %s165, %s167
      %p171 = scmp.eq.s32.totalorder %s23, 0
      %p172 = por %p170, %p171
      %p173 = scmp.ne.s32.totalorder %s165, %s167
      %p174 = scmp.eq.s32.totalorder %s28, 1
      %p175 = por %p173, %p174
      %p176 = scmp.ne.s32.totalorder %s167, %s168
      %p177 = scmp.eq.s32.totalorder %s28, 0
      %p178 = por %p176, %p177
      %p179 = scmp.ne.s32.totalorder %s167, %s168
      %p180 = scmp.eq.s32.totalorder %s29, 1
      %p181 = por %p179, %p180
      %p183 = scmp.ne.s32.totalorder %s168, %s182
      %p184 = scmp.eq.s32.totalorder %s29, 0
      %p185 = por %p183, %p184
      %s187 = sadd.s32 %s186, 1
      %p190 = scmp.eq.s32.totalorder %s23, 1
      %p191 = scmp.ne.s32.totalorder %s186, %s188
      %p192 = scmp.eq.s32.totalorder %s23, 0
      %p193 = por %p191, %p192
      %p194 = scmp.ne.s32.totalorder %s186, %s188
      %p195 = scmp.eq.s32.totalorder %s28, 1
      %p196 = por %p194, %p195
      %p197 = scmp.ne.s32.totalorder %s188, %s189
      %p198 = scmp.eq.s32.totalorder %s28, 0
      %p199 = por %p197, %p198
      %p200 = scmp.ne.s32.totalorder %s188, %s189
      %p201 = scmp.eq.s32.totalorder %s29, 1
      %p202 = por %p200, %p201
      %p204 = scmp.ne.s32.totalorder %s189, %s203
      %p205 = scmp.eq.s32.totalorder %s29, 0
      %p206 = por %p204, %p205
      %s207 = ssub.s32 %s30, %s42
      %s208 = ssub.s32 %s31, %s38
      %s209 = sor.u32 %s207, %s208
      %p210 = scmp.eq.s32.totalorder %s209, 0
      %s212 = sadd.s32 %s211, 1
      %s213 = scalar_select %p210, %s211, %s212
      %p216 = pneg %p210
      %p217 = scmp.eq.s32.totalorder %s23, 1
      %p218 = por %p216, %p217
      %p219 = scmp.ne.s32.totalorder %s211, %s214
      %p220 = scmp.eq.s32.totalorder %s23, 0
      %p221 = por %p219, %p220
      %p222 = scmp.ne.s32.totalorder %s211, %s214
      %p223 = scmp.eq.s32.totalorder %s28, 1
      %p224 = por %p222, %p223
      %p225 = scmp.ne.s32.totalorder %s214, %s215
      %p226 = scmp.eq.s32.totalorder %s28, 0
      %p227 = por %p225, %p226
      %p228 = scmp.ne.s32.totalorder %s214, %s215
      %p229 = scmp.eq.s32.totalorder %s29, 1
      %p230 = por %p228, %p229
      %p232 = scmp.ne.s32.totalorder %s215, %s231
      %p233 = scmp.eq.s32.totalorder %s29, 0
      %p234 = por %p232, %p233
      %p235 = scmp.le.s32.totalorder 1, %s23
      %p236 = scmp.lt.s32.totalorder %s23, 3
      %p237 = pnand %p235, %p236
      %p238 = pneg %p237
      // Predicated region
      $region9: #{tpu_custom_call.1} parent=5 // pred_check
        _
      $region10: #{tpu_custom_call.1} parent=5 // pred_check_branch
        %240 = sbr.rel (%p237) target = $region12
      $region11: #{tpu_custom_call.1} parent=5 // pred_region
        %s241 = ssub.s32 %s23, 1
        // Predicated region
        $region13: #{tpu_custom_call.1} parent=11 // pred_check
          %p242 = pneg %p136
        $region14: #{tpu_custom_call.1} parent=11 // pred_check_branch
          %244 = sbr.rel (%p242) target = $region16
        $region15: #{tpu_custom_call.1} parent=11 // pred_region
          %s246 = ssub.s32 1536, 1536
          %247 = vsyncadd [#allocation13], %s246
          %s248 = sshll.u32 [#allocation12], 4
          %s249 = int_to_ptr.vmem [resolvable:$true] %s248
          %254 = dma.hbm_to_vmem [thread:$0]  %s3, 1536, %s249, [#allocation13], 128, 128, 8
        $region16: #{tpu_custom_call.1} parent=11 // pred_fallthru
          _
        // Predicated region
        $region17: #{tpu_custom_call.1} parent=11 // pred_check
          %p255 = pneg %p157
        $region18: #{tpu_custom_call.1} parent=11 // pred_check_branch
          %257 = sbr.rel (%p255) target = $region20
        $region19: #{tpu_custom_call.1} parent=11 // pred_region
          _
        $region20: #{tpu_custom_call.1} parent=11 // pred_fallthru
          _
        // Predicated region
        $region21: #{tpu_custom_call.1} parent=11 // pred_check
          %p258 = pneg %p178
        $region22: #{tpu_custom_call.1} parent=11 // pred_check_branch
          %260 = sbr.rel (%p258) target = $region24
        $region23: #{tpu_custom_call.1} parent=11 // pred_region
          %s262 = ssub.s32 512, 512
          %263 = vsyncadd [#allocation13], %s262
          %s264 = sshll.u32 [#allocation14], 4
          %s265 = int_to_ptr.vmem [resolvable:$true] %s264
          %270 = dma.hbm_to_vmem [thread:$0]  %s5, 512, %s265, [#allocation13], 128, 128, 8
        $region24: #{tpu_custom_call.1} parent=11 // pred_fallthru
          _
        // Predicated region
        $region25: #{tpu_custom_call.1} parent=11 // pred_check
          %p271 = pneg %p199
        $region26: #{tpu_custom_call.1} parent=11 // pred_check_branch
          %273 = sbr.rel (%p271) target = $region28
        $region27: #{tpu_custom_call.1} parent=11 // pred_region
          _
        $region28: #{tpu_custom_call.1} parent=11 // pred_fallthru
          _
      $region12: #{tpu_custom_call.1} parent=5 // pred_fallthru
        _
      %p274 = scmp.lt.s32.totalorder %s23, 2
      // Predicated region
      $region29: #{tpu_custom_call.1} parent=5 // pred_check
        %p275 = pneg %p274
      $region30: #{tpu_custom_call.1} parent=5 // pred_check_branch
        %277 = sbr.rel (%p275) target = $region32
      $region31: #{tpu_custom_call.1} parent=5 // pred_region
        // Predicated region
        $region33: #{tpu_custom_call.1} parent=31 // pred_check
          %p278 = pneg %p57
        $region34: #{tpu_custom_call.1} parent=31 // pred_check_branch
          %280 = sbr.rel (%p278) target = $region36
        $region35: #{tpu_custom_call.1} parent=31 // pred_region
          %s281 = sand.u32 %s47, 1
          %s282 = scalar_lea.sflag [#allocation7], %s281
          %s283 = sand.u32 %s47, 1
          %s284 = smul.addr %s283, 16
          %s285 = scalar_lea.vmem [#allocation6], %s284
          %s286 = smul.u32 2, %s31
          %s288 = ssub.s32 256, 256
          %289 = vsyncadd %s282, %s288
          %s290 = smul.addr %s30, 2
          %s291 = sadd.s32 %s286, %s290
          %s292 = smul.addr %s291, 128
          %s293 = scalar_lea.hbm %s0, %s292
          %s294 = sshll.u32 %s285, 4
          %s295 = int_to_ptr.vmem [resolvable:$true] %s294
          %300 = dma.hbm_to_vmem [thread:$0]  %s293, 256, %s295, %s282, 128, 128, 8
        $region36: #{tpu_custom_call.1} parent=31 // pred_fallthru
          _
        // Predicated region
        $region37: #{tpu_custom_call.1} parent=31 // pred_check
          %p301 = pneg %p83
        $region38: #{tpu_custom_call.1} parent=31 // pred_check_branch
          %303 = sbr.rel (%p301) target = $region40
        $region39: #{tpu_custom_call.1} parent=31 // pred_region
          %s304 = sand.u32 %s23, 1
          %s305 = scalar_lea.sflag [#allocation10], %s304
          %s306 = sand.u32 %s73, 1
          %s307 = smul.addr %s306, 8
          %s308 = scalar_lea.vmem [#allocation9], %s307
          %s310 = ssub.s32 128, 128
          %311 = vsyncadd %s305, %s310
          %s312 = smul.addr %s30, 128
          %s313 = scalar_lea.hbm %s1, %s312
          %s315 = sshll.u32 %s308, 4
          %s316 = int_to_ptr.vmem [resolvable:$true] %s315
          %318 = dma.hbm_to_vmem [thread:$0]  %s313, 128, %s316, %s305
        $region40: #{tpu_custom_call.1} parent=31 // pred_fallthru
          _
        // Predicated region
        $region41: #{tpu_custom_call.1} parent=31 // pred_check
          %p319 = pneg %p109
        $region42: #{tpu_custom_call.1} parent=31 // pred_check_branch
          %321 = sbr.rel (%p319) target = $region44
        $region43: #{tpu_custom_call.1} parent=31 // pred_region
          %s322 = sand.u32 %s23, 1
          %s323 = scalar_lea.sflag [#allocation10], %s322
          %s324 = sand.u32 %s99, 1
          %s325 = smul.addr %s324, 8
          %s326 = scalar_lea.vmem [#allocation11], %s325
          %s328 = ssub.s32 128, 128
          %329 = vsyncadd %s323, %s328
          %s330 = smul.addr %s30, 128
          %s331 = scalar_lea.hbm %s2, %s330
          %s333 = sshll.u32 %s326, 4
          %s334 = int_to_ptr.vmem [resolvable:$true] %s333
          %336 = dma.hbm_to_vmem [thread:$0]  %s331, 128, %s334, %s323
        $region44: #{tpu_custom_call.1} parent=31 // pred_fallthru
          _
      $region32: #{tpu_custom_call.1} parent=5 // pred_fallthru
        _
      %p337 = scmp.le.s32.totalorder 1, %s23
      %p338 = scmp.lt.s32.totalorder %s23, 3
      %p339 = pnand %p337, %p338
      %p340 = pneg %p339
      // Predicated region
      $region45: #{tpu_custom_call.1} parent=5 // pred_check
        _
      $region46: #{tpu_custom_call.1} parent=5 // pred_check_branch
        %342 = sbr.rel (%p339) target = $region48
      $region47: #{tpu_custom_call.1} parent=5 // pred_region
        %s343 = ssub.s32 %s23, 1
        %s344 = sand.u32 %s50, 1
        %s345 = scalar_lea.sflag [#allocation7], %s344
        %s346 = sand.u32 %s50, 1
        %s347 = smul.addr %s346, 16
        %s348 = scalar_lea.vmem [#allocation6], %s347
        // Predicated region
        $region49: #{tpu_custom_call.1} parent=47 // pred_check
          %p349 = pneg %p63
        $region50: #{tpu_custom_call.1} parent=47 // pred_check_branch
          %351 = sbr.rel (%p349) target = $region52
        $region51: #{tpu_custom_call.1} parent=47 // pred_region
          %352 = dma.done %s345, 256
        $region52: #{tpu_custom_call.1} parent=47 // pred_fallthru
          _
        %s353 = sand.u32 %s28, 1
        %s354 = scalar_lea.sflag [#allocation10], %s353
        %s355 = sand.u32 %s76, 1
        %s356 = smul.addr %s355, 8
        %s357 = scalar_lea.vmem [#allocation9], %s356
        // Predicated region
        $region53: #{tpu_custom_call.1} parent=47 // pred_check
          %p358 = pneg %p89
        $region54: #{tpu_custom_call.1} parent=47 // pred_check_branch
          %360 = sbr.rel (%p358) target = $region56
        $region55: #{tpu_custom_call.1} parent=47 // pred_region
          %361 = dma.done %s354, 128
        $region56: #{tpu_custom_call.1} parent=47 // pred_fallthru
          _
        %s362 = sand.u32 %s28, 1
        %s363 = scalar_lea.sflag [#allocation10], %s362
        %s364 = sand.u32 %s102, 1
        %s365 = smul.addr %s364, 8
        %s366 = scalar_lea.vmem [#allocation11], %s365
        // Predicated region
        $region57: #{tpu_custom_call.1} parent=47 // pred_check
          %p367 = pneg %p115
        $region58: #{tpu_custom_call.1} parent=47 // pred_check_branch
          %369 = sbr.rel (%p367) target = $region60
        $region59: #{tpu_custom_call.1} parent=47 // pred_region
          %370 = dma.done %s363, 128
        $region60: #{tpu_custom_call.1} parent=47 // pred_fallthru
          _
        // Predicated region
        $region61: #{tpu_custom_call.1} parent=47 // pred_check
          %p371 = pneg %p136
        $region62: #{tpu_custom_call.1} parent=47 // pred_check_branch
          %373 = sbr.rel (%p371) target = $region64
        $region63: #{tpu_custom_call.1} parent=47 // pred_region
          %374 = dma.done [#allocation13], 1536
        $region64: #{tpu_custom_call.1} parent=47 // pred_fallthru
          _
        // Predicated region
        $region65: #{tpu_custom_call.1} parent=47 // pred_check
          %p375 = pneg %p178
        $region66: #{tpu_custom_call.1} parent=47 // pred_check_branch
          %377 = sbr.rel (%p375) target = $region68
        $region67: #{tpu_custom_call.1} parent=47 // pred_region
          %378 = dma.done [#allocation13], 512
        $region68: #{tpu_custom_call.1} parent=47 // pred_fallthru
          _
        %s379 = sand.u32 %s50, 1
        %s380 = scalar_lea.sflag [#allocation7], %s379
        %s381 = sand.u32 %s50, 1
        %s382 = smul.addr %s381, 16
        %s383 = scalar_lea.vmem [#allocation6], %s382
        %p384 = pneg %p63
        %p385 = pneg %p60
        %s386 = sand.u32 %s28, 1
        %s387 = scalar_lea.sflag [#allocation10], %s386
        %s388 = sand.u32 %s76, 1
        %s389 = smul.addr %s388, 8
        %s390 = scalar_lea.vmem [#allocation9], %s389
        %p391 = pneg %p89
        %p392 = pneg %p86
        %s393 = sand.u32 %s28, 1
        %s394 = scalar_lea.sflag [#allocation10], %s393
        %s395 = sand.u32 %s102, 1
        %s396 = smul.addr %s395, 8
        %s397 = scalar_lea.vmem [#allocation11], %s396
        %p398 = pneg %p115
        %p399 = pneg %p112
        %p400 = pneg %p136
        %p401 = pneg %p133
        %p402 = pneg %p157
        %p403 = pneg %p154
        %p404 = pneg %p178
        %p405 = pneg %p175
        %p406 = pneg %p199
        %p407 = pneg %p196
        %p408 = pneg %p227
        %p409 = pneg %p224
        %s410 = sand.u32 %s214, 1
        %s411 = scalar_lea.sflag [#allocation8], %s410
        %s412 = sand.u32 %s214, 1
        %s413 = smul.addr %s412, 16
        %s414 = scalar_lea.vmem [#allocation15], %s413
        %s415 = smul.u32 2, %s33
        %s416 = smul.u32 2, %s33
        %v417 = vld [vmem:[%s348] sm:$0xff]
        %v418 = vld [vmem:[%s348 + $0x8] sm:$0xff]
        %v419 = vld [vmem:[#allocation12] sm:$0xff]
        %v420 = vld [vmem:[#allocation12 + $0x8] sm:$0xff]
        %v421 = vld [vmem:[#allocation12 + $0x10] sm:$0xff]
        %v422 = vld [vmem:[#allocation12 + $0x18] sm:$0xff]
        %v423 = vld [vmem:[%s4] sm:$0x1]
        %v425 = vlaneseq
        %v426 = vshrl.u32 %v425, 7
        %v427 = vsub.s32 0, %v426
        %v428 = vrot.slane %v423, %v427
        %vm430 = vcmask 261120
        %v432 = vsel %vm430, %v417, 0
        %v435 = vsel %vm430, %v418, 0
        %437 = vmatprep.subr.mxu0 0.0
        %438 = vmatpush1.msra.mxu0 %v419
        %439 = vmatprep.subr.mxu0 0.0
        %440 = vmatpush1.msra.mxu0 %v420
        %441 = vmatprep.subr.mxu0 0.0
        %442 = vmatpush1.msra.mxu0 %v421
        %443 = vmatprep.subr.mxu0 0.0
        %444 = vmatpush1.msra.mxu0 %v422
        %445 = vmatprep.subr.mxu0 0.0
        %446 = vmatpush1.msra.mxu0 0.0
        %447 = vmatprep.subr.mxu0 0.0
        %448 = vmatpush1.msra.mxu0 0.0
        %449 = vmatprep.subr.mxu0 0.0
        %450 = vmatpush1.msra.mxu0 0.0
        %451 = vmatprep.subr.mxu0 0.0
        %452 = vmatpush1.msra.mxu0 0.0
        %453 = vmatprep.subr.mxu0 0.0
        %454 = vmatpush1.msra.mxu0 0.0
        %455 = vmatprep.subr.mxu0 0.0
        %456 = vmatpush1.msra.mxu0 0.0
        %457 = vmatprep.subr.mxu0 0.0
        %458 = vmatpush1.msra.mxu0 0.0
        %459 = vmatprep.subr.mxu0 0.0
        %460 = vmatpush1.msra.mxu0 0.0
        %461 = vmatprep.subr.mxu0 0.0
        %462 = vmatpush1.msra.mxu0 0.0
        %463 = vmatprep.subr.mxu0 0.0
        %464 = vmatpush1.msra.mxu0 0.0
        %465 = vmatprep.subr.mxu0 0.0
        %466 = vmatpush1.msra.mxu0 0.0
        %467 = vmatprep.subr.mxu0 0.0
        %468 = vmatpush1.msra.mxu0 0.0
        %469 = vmatprep.subr.mxu0 0.0
        %470 = vmatpush1.msra.mxu0 0.0
        %471 = vmatprep.subr.mxu0 0.0
        %472 = vmatpush1.msra.mxu0 0.0
        %473 = vmatprep.subr.mxu0 0.0
        %474 = vmatpush1.msra.mxu0 0.0
        %475 = vmatprep.subr.mxu0 0.0
        %476 = vmatpush1.msra.mxu0 0.0
        %477 = vmatprep.subr.mxu0 0.0
        %478 = vmatpush1.msra.mxu0 0.0
        %479 = vmatprep.subr.mxu0 0.0
        %480 = vmatpush1.msra.mxu0 0.0
        %481 = vmatprep.subr.mxu0 0.0
        %482 = vmatpush1.msra.mxu0 0.0
        %483 = vmatprep.subr.mxu0 0.0
        %484 = vmatpush1.msra.mxu0 0.0
        %485 = vmatprep.subr.mxu0 0.0
        %486 = vmatpush1.msra.mxu0 0.0
        %487 = vmatprep.subr.mxu0 0.0
        %488 = vmatpush1.msra.mxu0 0.0
        %489 = vmatprep.subr.mxu0 0.0
        %490 = vmatpush1.msra.mxu0 0.0
        %491 = vmatprep.subr.mxu0 0.0
        %492 = vmatpush1.msra.mxu0 0.0
        %493 = vmatprep.subr.mxu0 0.0
        %494 = vmatpush1.msra.mxu0 0.0
        %495 = vmatprep.subr.mxu0 0.0
        %496 = vmatpush1.msra.mxu0 0.0
        %497 = vmatprep.subr.mxu0 0.0
        %498 = vmatpush1.msra.mxu0 0.0
        %499 = vmatprep.subr.mxu0 0.0
        %500 = vmatpush1.msra.mxu0 0.0
        %501 = vmatprep.mubr.f32.mxu0 0.0
        %502 = vmatmul.mubr.f32.gmra.mrb[0].mxu0 %v432
        %v503 = vpop.f32.mrb[0].mxu0
        %v504 = vadd.f32 %v428, %v503
        %v505 = vpop.f32.mrb[0].mxu0
        %506 = vmatprep.mubr.f32.mxu0 0.0
        %507 = vmatmul.mubr.f32.gmra.mrb[0].mxu0 %v435
        %v508 = vpop.f32.mrb[0].mxu0
        %v509 = vadd.f32 %v428, %v508
        %v510 = vpop.f32.mrb[0].mxu0
        %511 = vdwg.mxu0
        %512 = vst.msk [vmem:[#allocation2] sm:$0xff] %vm430, %v504
        %513 = vst.msk [vmem:[#allocation2 + $0x8] sm:$0xff] %vm430, %v509
        %v514 = vld [vmem:[%s357] sm:$0xff]
        %s515 = scalar_lea.vmem [#allocation12], 32
        %v516 = vld [vmem:[%s515] sm:$0xff]
        %v517 = vld [vmem:[%s515 + $0x8] sm:$0xff]
        %v518 = vld [vmem:[%s515 + $0x10] sm:$0xff]
        %v519 = vld [vmem:[%s515 + $0x18] sm:$0xff]
        %s520 = scalar_lea.vmem %s4, 1
        %v521 = vld [vmem:[%s520] sm:$0x1]
        %v523 = vlaneseq
        %v524 = vshrl.u32 %v523, 7
        %v525 = vsub.s32 0, %v524
        %v526 = vrot.slane %v521, %v525
        %v529 = vsel %vm430, %v514, 0
        %531 = vmatprep.subr.mxu0 0.0
        %532 = vmatpush1.msra.mxu0 %v516
        %533 = vmatprep.subr.mxu0 0.0
        %534 = vmatpush1.msra.mxu0 %v517
        %535 = vmatprep.subr.mxu0 0.0
        %536 = vmatpush1.msra.mxu0 %v518
        %537 = vmatprep.subr.mxu0 0.0
        %538 = vmatpush1.msra.mxu0 %v519
        %539 = vmatprep.subr.mxu0 0.0
        %540 = vmatpush1.msra.mxu0 0.0
        %541 = vmatprep.subr.mxu0 0.0
        %542 = vmatpush1.msra.mxu0 0.0
        %543 = vmatprep.subr.mxu0 0.0
        %544 = vmatpush1.msra.mxu0 0.0
        %545 = vmatprep.subr.mxu0 0.0
        %546 = vmatpush1.msra.mxu0 0.0
        %547 = vmatprep.subr.mxu0 0.0
        %548 = vmatpush1.msra.mxu0 0.0
        %549 = vmatprep.subr.mxu0 0.0
        %550 = vmatpush1.msra.mxu0 0.0
        %551 = vmatprep.subr.mxu0 0.0
        %552 = vmatpush1.msra.mxu0 0.0
        %553 = vmatprep.subr.mxu0 0.0
        %554 = vmatpush1.msra.mxu0 0.0
        %555 = vmatprep.subr.mxu0 0.0
        %556 = vmatpush1.msra.mxu0 0.0
        %557 = vmatprep.subr.mxu0 0.0
        %558 = vmatpush1.msra.mxu0 0.0
        %559 = vmatprep.subr.mxu0 0.0
        %560 = vmatpush1.msra.mxu0 0.0
        %561 = vmatprep.subr.mxu0 0.0
        %562 = vmatpush1.msra.mxu0 0.0
        %563 = vmatprep.subr.mxu0 0.0
        %564 = vmatpush1.msra.mxu0 0.0
        %565 = vmatprep.subr.mxu0 0.0
        %566 = vmatpush1.msra.mxu0 0.0
        %567 = vmatprep.subr.mxu0 0.0
        %568 = vmatpush1.msra.mxu0 0.0
        %569 = vmatprep.subr.mxu0 0.0
        %570 = vmatpush1.msra.mxu0 0.0
        %571 = vmatprep.subr.mxu0 0.0
        %572 = vmatpush1.msra.mxu0 0.0
        %573 = vmatprep.subr.mxu0 0.0
        %574 = vmatpush1.msra.mxu0 0.0
        %575 = vmatprep.subr.mxu0 0.0
        %576 = vmatpush1.msra.mxu0 0.0
        %577 = vmatprep.subr.mxu0 0.0
        %578 = vmatpush1.msra.mxu0 0.0
        %579 = vmatprep.subr.mxu0 0.0
        %580 = vmatpush1.msra.mxu0 0.0
        %581 = vmatprep.subr.mxu0 0.0
        %582 = vmatpush1.msra.mxu0 0.0
        %583 = vmatprep.subr.mxu0 0.0
        %584 = vmatpush1.msra.mxu0 0.0
        %585 = vmatprep.subr.mxu0 0.0
        %586 = vmatpush1.msra.mxu0 0.0
        %587 = vmatprep.subr.mxu0 0.0
        %588 = vmatpush1.msra.mxu0 0.0
        %589 = vmatprep.subr.mxu0 0.0
        %590 = vmatpush1.msra.mxu0 0.0
        %591 = vmatprep.subr.mxu0 0.0
        %592 = vmatpush1.msra.mxu0 0.0
        %593 = vmatprep.subr.mxu0 0.0
        %594 = vmatpush1.msra.mxu0 0.0
        %595 = vmatprep.mubr.f32.mxu0 0.0
        %596 = vmatmul.mubr.f32.gmra.mrb[0].mxu0 %v529
        %v597 = vpop.f32.mrb[0].mxu0
        %v598 = vadd.f32 %v526, %v597
        %v599 = vpop.f32.mrb[0].mxu0
        %600 = vdwg.mxu0
        %601 = vst.msk [vmem:[#allocation3] sm:$0xff] %vm430, %v598
        %v602 = vld [vmem:[%s366] sm:$0xff]
        %s603 = scalar_lea.vmem [#allocation12], 64
        %v604 = vld [vmem:[%s603] sm:$0xff]
        %v605 = vld [vmem:[%s603 + $0x8] sm:$0xff]
        %v606 = vld [vmem:[%s603 + $0x10] sm:$0xff]
        %v607 = vld [vmem:[%s603 + $0x18] sm:$0xff]
        %s608 = scalar_lea.vmem %s4, 2
        %v609 = vld [vmem:[%s608] sm:$0x1]
        %v611 = vlaneseq
        %v612 = vshrl.u32 %v611, 7
        %v613 = vsub.s32 0, %v612
        %v614 = vrot.slane %v609, %v613
        %v617 = vsel %vm430, %v602, 0
        %619 = vmatprep.subr.mxu0 0.0
        %620 = vmatpush1.msra.mxu0 %v604
        %621 = vmatprep.subr.mxu0 0.0
        %622 = vmatpush1.msra.mxu0 %v605
        %623 = vmatprep.subr.mxu0 0.0
        %624 = vmatpush1.msra.mxu0 %v606
        %625 = vmatprep.subr.mxu0 0.0
        %626 = vmatpush1.msra.mxu0 %v607
        %627 = vmatprep.subr.mxu0 0.0
        %628 = vmatpush1.msra.mxu0 0.0
        %629 = vmatprep.subr.mxu0 0.0
        %630 = vmatpush1.msra.mxu0 0.0
        %631 = vmatprep.subr.mxu0 0.0
        %632 = vmatpush1.msra.mxu0 0.0
        %633 = vmatprep.subr.mxu0 0.0
        %634 = vmatpush1.msra.mxu0 0.0
        %635 = vmatprep.subr.mxu0 0.0
        %636 = vmatpush1.msra.mxu0 0.0
        %637 = vmatprep.subr.mxu0 0.0
        %638 = vmatpush1.msra.mxu0 0.0
        %639 = vmatprep.subr.mxu0 0.0
        %640 = vmatpush1.msra.mxu0 0.0
        %641 = vmatprep.subr.mxu0 0.0
        %642 = vmatpush1.msra.mxu0 0.0
        %643 = vmatprep.subr.mxu0 0.0
        %644 = vmatpush1.msra.mxu0 0.0
        %645 = vmatprep.subr.mxu0 0.0
        %646 = vmatpush1.msra.mxu0 0.0
        %647 = vmatprep.subr.mxu0 0.0
        %648 = vmatpush1.msra.mxu0 0.0
        %649 = vmatprep.subr.mxu0 0.0
        %650 = vmatpush1.msra.mxu0 0.0
        %651 = vmatprep.subr.mxu0 0.0
        %652 = vmatpush1.msra.mxu0 0.0
        %653 = vmatprep.subr.mxu0 0.0
        %654 = vmatpush1.msra.mxu0 0.0
        %655 = vmatprep.subr.mxu0 0.0
        %656 = vmatpush1.msra.mxu0 0.0
        %657 = vmatprep.subr.mxu0 0.0
        %658 = vmatpush1.msra.mxu0 0.0
        %659 = vmatprep.subr.mxu0 0.0
        %660 = vmatpush1.msra.mxu0 0.0
        %661 = vmatprep.subr.mxu0 0.0
        %662 = vmatpush1.msra.mxu0 0.0
        %663 = vmatprep.subr.mxu0 0.0
        %664 = vmatpush1.msra.mxu0 0.0
        %665 = vmatprep.subr.mxu0 0.0
        %666 = vmatpush1.msra.mxu0 0.0
        %667 = vmatprep.subr.mxu0 0.0
        %668 = vmatpush1.msra.mxu0 0.0
        %669 = vmatprep.subr.mxu0 0.0
        %670 = vmatpush1.msra.mxu0 0.0
        %671 = vmatprep.subr.mxu0 0.0
        %672 = vmatpush1.msra.mxu0 0.0
        %673 = vmatprep.subr.mxu0 0.0
        %674 = vmatpush1.msra.mxu0 0.0
        %675 = vmatprep.subr.mxu0 0.0
        %676 = vmatpush1.msra.mxu0 0.0
        %677 = vmatprep.subr.mxu0 0.0
        %678 = vmatpush1.msra.mxu0 0.0
        %679 = vmatprep.subr.mxu0 0.0
        %680 = vmatpush1.msra.mxu0 0.0
        %681 = vmatprep.subr.mxu0 0.0
        %682 = vmatpush1.msra.mxu0 0.0
        %683 = vmatprep.mubr.f32.mxu0 0.0
        %684 = vmatmul.mubr.f32.gmra.mrb[0].mxu0 %v617
        %v685 = vpop.f32.mrb[0].mxu0
        %v686 = vadd.f32 %v614, %v685
        %v687 = vpop.f32.mrb[0].mxu0
        %688 = vdwg.mxu0
        %689 = vst.msk [vmem:[#allocation4] sm:$0xff] %vm430, %v686
        %v690 = vld [vmem:[#allocation2] sm:$0xff]
        %v691 = vld [vmem:[#allocation2 + $0x8] sm:$0xff]
        %v692 = vld [vmem:[#allocation3] sm:$0xff]
        %vm693 = vcmask 31744
        %v695 = vsel %vm693, %v690, 0
        %v698 = vsel %vm693, %v691, 0
        %v701 = vsel %vm693, %v692, 0
        %703 = vmatprep.subr.mxu0 0.0
        %704 = vmatpush1.xpose.msra.mxu0 %v701
        %705 = vmatprep.subr.mxu0 0.0
        %706 = vmatpush1.xpose.msra.mxu0 0.0
        %707 = vmatprep.subr.mxu0 0.0
        %708 = vmatpush1.xpose.msra.mxu0 0.0
        %709 = vmatprep.subr.mxu0 0.0
        %710 = vmatpush1.xpose.msra.mxu0 0.0
        %711 = vmatprep.subr.mxu0 0.0
        %712 = vmatpush1.xpose.msra.mxu0 0.0
        %713 = vmatprep.subr.mxu0 0.0
        %714 = vmatpush1.xpose.msra.mxu0 0.0
        %715 = vmatprep.subr.mxu0 0.0
        %716 = vmatpush1.xpose.msra.mxu0 0.0
        %717 = vmatprep.subr.mxu0 0.0
        %718 = vmatpush1.xpose.msra.mxu0 0.0
        %719 = vmatprep.subr.mxu0 0.0
        %720 = vmatpush1.xpose.msra.mxu0 0.0
        %721 = vmatprep.subr.mxu0 0.0
        %722 = vmatpush1.xpose.msra.mxu0 0.0
        %723 = vmatprep.subr.mxu0 0.0
        %724 = vmatpush1.xpose.msra.mxu0 0.0
        %725 = vmatprep.subr.mxu0 0.0
        %726 = vmatpush1.xpose.msra.mxu0 0.0
        %727 = vmatprep.subr.mxu0 0.0
        %728 = vmatpush1.xpose.msra.mxu0 0.0
        %729 = vmatprep.subr.mxu0 0.0
        %730 = vmatpush1.xpose.msra.mxu0 0.0
        %731 = vmatprep.subr.mxu0 0.0
        %732 = vmatpush1.xpose.msra.mxu0 0.0
        %733 = vmatprep.subr.mxu0 0.0
        %734 = vmatpush1.xpose.msra.mxu0 0.0
        %735 = vmatprep.subr.mxu0 0.0
        %736 = vmatpush1.xpose.msra.mxu0 0.0
        %737 = vmatprep.subr.mxu0 0.0
        %738 = vmatpush1.xpose.msra.mxu0 0.0
        %739 = vmatprep.subr.mxu0 0.0
        %740 = vmatpush1.xpose.msra.mxu0 0.0
        %741 = vmatprep.subr.mxu0 0.0
        %742 = vmatpush1.xpose.msra.mxu0 0.0
        %743 = vmatprep.subr.mxu0 0.0
        %744 = vmatpush1.xpose.msra.mxu0 0.0
        %745 = vmatprep.subr.mxu0 0.0
        %746 = vmatpush1.xpose.msra.mxu0 0.0
        %747 = vmatprep.subr.mxu0 0.0
        %748 = vmatpush1.xpose.msra.mxu0 0.0
        %749 = vmatprep.subr.mxu0 0.0
        %750 = vmatpush1.xpose.msra.mxu0 0.0
        %751 = vmatprep.subr.mxu0 0.0
        %752 = vmatpush1.xpose.msra.mxu0 0.0
        %753 = vmatprep.subr.mxu0 0.0
        %754 = vmatpush1.xpose.msra.mxu0 0.0
        %755 = vmatprep.subr.mxu0 0.0
        %756 = vmatpush1.xpose.msra.mxu0 0.0
        %757 = vmatprep.subr.mxu0 0.0
        %758 = vmatpush1.xpose.msra.mxu0 0.0
        %759 = vmatprep.subr.mxu0 0.0
        %760 = vmatpush1.xpose.msra.mxu0 0.0
        %761 = vmatprep.subr.mxu0 0.0
        %762 = vmatpush1.xpose.msra.mxu0 0.0
        %763 = vmatprep.subr.mxu0 0.0
        %764 = vmatpush1.xpose.msra.mxu0 0.0
        %765 = vmatprep.subr.mxu0 0.0
        %766 = vmatpush1.xpose.msra.mxu0 0.0
        %767 = vmatprep.mubr.f32.mxu0 0.0
        %768 = vmatmul.mubr.f32.gmra.mrb[0].mxu0 %v695
        %v769 = vpop.f32.mrb[0].mxu0
        %v770 = vadd.f32 0.0, %v769
        %v771 = vpop.f32.mrb[0].mxu0
        %772 = vmatprep.mubr.f32.mxu0 0.0
        %773 = vmatmul.mubr.f32.gmra.mrb[0].mxu0 %v698
        %v774 = vpop.f32.mrb[0].mxu0
        %v775 = vadd.f32 0.0, %v774
        %v776 = vpop.f32.mrb[0].mxu0
        %777 = vdwg.mxu0
        %vm778 = vcmask 64512
        %v779 = vsel %vm778, %v770, -inf
        %780 = vmax.xlane.f32.xlu0 %v779
        %v781 = vpop.xlane.xlu0 %780
        %v782 = vsel %vm778, %v775, -inf
        %783 = vmax.xlane.f32.xlu0 %v782
        %v784 = vpop.xlane.xlu0 %783
        %v785 = vsub.f32 %v770, %v781
        %v786 = vsub.f32 %v775, %v784
        %v787 = vmul.f32 %v785, 1.442695
        %v788 = vpow.pop %v787
        %v789 = vmul.f32 %v786, 1.442695
        %v790 = vpow.pop %v789
        %v791 = vsel %vm778, %v788, 0.0
        %792 = vadd.xlane.f32.xlu0 %v791
        %v793 = vpop.xlane.xlu0 %792
        %v794 = vsel %vm778, %v790, 0.0
        %795 = vadd.xlane.f32.xlu0 %v794
        %v796 = vpop.xlane.xlu0 %795
        %v797 = vrcp.pop %v793
        %v798 = vrcp.pop %v796
        %v799 = vmul.f32 %v788, %v797
        %v800 = vmul.f32 %v790, %v798
        %v801 = vld [vmem:[#allocation4] sm:$0xff]
        %v803 = vsel %vm778, %v799, 0
        %v806 = vsel %vm778, %v800, 0
        %808 = vmatprep.subr.mxu0 0.0
        %809 = vmatpush1.msra.mxu0 %v801
        %810 = vmatprep.subr.mxu0 0.0
        %811 = vmatpush1.msra.mxu0 0.0
        %812 = vmatprep.subr.mxu0 0.0
        %813 = vmatpush1.msra.mxu0 0.0
        %814 = vmatprep.subr.mxu0 0.0
        %815 = vmatpush1.msra.mxu0 0.0
        %816 = vmatprep.subr.mxu0 0.0
        %817 = vmatpush1.msra.mxu0 0.0
        %818 = vmatprep.subr.mxu0 0.0
        %819 = vmatpush1.msra.mxu0 0.0
        %820 = vmatprep.subr.mxu0 0.0
        %821 = vmatpush1.msra.mxu0 0.0
        %822 = vmatprep.subr.mxu0 0.0
        %823 = vmatpush1.msra.mxu0 0.0
        %824 = vmatprep.subr.mxu0 0.0
        %825 = vmatpush1.msra.mxu0 0.0
        %826 = vmatprep.subr.mxu0 0.0
        %827 = vmatpush1.msra.mxu0 0.0
        %828 = vmatprep.subr.mxu0 0.0
        %829 = vmatpush1.msra.mxu0 0.0
        %830 = vmatprep.subr.mxu0 0.0
        %831 = vmatpush1.msra.mxu0 0.0
        %832 = vmatprep.subr.mxu0 0.0
        %833 = vmatpush1.msra.mxu0 0.0
        %834 = vmatprep.subr.mxu0 0.0
        %835 = vmatpush1.msra.mxu0 0.0
        %836 = vmatprep.subr.mxu0 0.0
        %837 = vmatpush1.msra.mxu0 0.0
        %838 = vmatprep.subr.mxu0 0.0
        %839 = vmatpush1.msra.mxu0 0.0
        %840 = vmatprep.subr.mxu0 0.0
        %841 = vmatpush1.msra.mxu0 0.0
        %842 = vmatprep.subr.mxu0 0.0
        %843 = vmatpush1.msra.mxu0 0.0
        %844 = vmatprep.subr.mxu0 0.0
        %845 = vmatpush1.msra.mxu0 0.0
        %846 = vmatprep.subr.mxu0 0.0
        %847 = vmatpush1.msra.mxu0 0.0
        %848 = vmatprep.subr.mxu0 0.0
        %849 = vmatpush1.msra.mxu0 0.0
        %850 = vmatprep.subr.mxu0 0.0
        %851 = vmatpush1.msra.mxu0 0.0
        %852 = vmatprep.subr.mxu0 0.0
        %853 = vmatpush1.msra.mxu0 0.0
        %854 = vmatprep.subr.mxu0 0.0
        %855 = vmatpush1.msra.mxu0 0.0
        %856 = vmatprep.subr.mxu0 0.0
        %857 = vmatpush1.msra.mxu0 0.0
        %858 = vmatprep.subr.mxu0 0.0
        %859 = vmatpush1.msra.mxu0 0.0
        %860 = vmatprep.subr.mxu0 0.0
        %861 = vmatpush1.msra.mxu0 0.0
        %862 = vmatprep.subr.mxu0 0.0
        %863 = vmatpush1.msra.mxu0 0.0
        %864 = vmatprep.subr.mxu0 0.0
        %865 = vmatpush1.msra.mxu0 0.0
        %866 = vmatprep.subr.mxu0 0.0
        %867 = vmatpush1.msra.mxu0 0.0
        %868 = vmatprep.subr.mxu0 0.0
        %869 = vmatpush1.msra.mxu0 0.0
        %870 = vmatprep.subr.mxu0 0.0
        %871 = vmatpush1.msra.mxu0 0.0
        %872 = vmatprep.mubr.f32.mxu0 0.0
        %873 = vmatmul.mubr.f32.gmra.mrb[0].mxu0 %v803
        %v874 = vpop.f32.mrb[0].mxu0
        %v875 = vadd.f32 0.0, %v874
        %v876 = vpop.f32.mrb[0].mxu0
        %877 = vmatprep.mubr.f32.mxu0 0.0
        %878 = vmatmul.mubr.f32.gmra.mrb[0].mxu0 %v806
        %v879 = vpop.f32.mrb[0].mxu0
        %v880 = vadd.f32 0.0, %v879
        %v881 = vpop.f32.mrb[0].mxu0
        %882 = vdwg.mxu0
        %883 = vst.msk [vmem:[#allocation5] sm:$0xff] %vm693, %v875
        %884 = vst.msk [vmem:[#allocation5 + $0x8] sm:$0xff] %vm693, %v880
        %v885 = vld [vmem:[#allocation2] sm:$0xff]
        %v886 = vld [vmem:[#allocation2 + $0x8] sm:$0xff]
        %v887 = vld [vmem:[#allocation3] sm:$0xff]
        %890 = vrot.lane.b32.xlu0 %v885, 124
        %v891 = vpop.permute.xlu0 %890
        %892 = vrot.lane.b32.xlu0 %v886, 124
        %v893 = vpop.permute.xlu0 %892
        %895 = vrot.lane.b32.xlu0 %v887, 124
        %v896 = vpop.permute.xlu0 %895
        %v897 = vsel %vm693, %v891, 0
        %v899 = vsel %vm693, %v893, 0
        %v901 = vsel %vm693, %v896, 0
        %903 = vmatprep.subr.mxu0 0.0
        %904 = vmatpush1.xpose.msra.mxu0 %v901
        %905 = vmatprep.subr.mxu0 0.0
        %906 = vmatpush1.xpose.msra.mxu0 0.0
        %907 = vmatprep.subr.mxu0 0.0
        %908 = vmatpush1.xpose.msra.mxu0 0.0
        %909 = vmatprep.subr.mxu0 0.0
        %910 = vmatpush1.xpose.msra.mxu0 0.0
        %911 = vmatprep.subr.mxu0 0.0
        %912 = vmatpush1.xpose.msra.mxu0 0.0
        %913 = vmatprep.subr.mxu0 0.0
        %914 = vmatpush1.xpose.msra.mxu0 0.0
        %915 = vmatprep.subr.mxu0 0.0
        %916 = vmatpush1.xpose.msra.mxu0 0.0
        %917 = vmatprep.subr.mxu0 0.0
        %918 = vmatpush1.xpose.msra.mxu0 0.0
        %919 = vmatprep.subr.mxu0 0.0
        %920 = vmatpush1.xpose.msra.mxu0 0.0
        %921 = vmatprep.subr.mxu0 0.0
        %922 = vmatpush1.xpose.msra.mxu0 0.0
        %923 = vmatprep.subr.mxu0 0.0
        %924 = vmatpush1.xpose.msra.mxu0 0.0
        %925 = vmatprep.subr.mxu0 0.0
        %926 = vmatpush1.xpose.msra.mxu0 0.0
        %927 = vmatprep.subr.mxu0 0.0
        %928 = vmatpush1.xpose.msra.mxu0 0.0
        %929 = vmatprep.subr.mxu0 0.0
        %930 = vmatpush1.xpose.msra.mxu0 0.0
        %931 = vmatprep.subr.mxu0 0.0
        %932 = vmatpush1.xpose.msra.mxu0 0.0
        %933 = vmatprep.subr.mxu0 0.0
        %934 = vmatpush1.xpose.msra.mxu0 0.0
        %935 = vmatprep.subr.mxu0 0.0
        %936 = vmatpush1.xpose.msra.mxu0 0.0
        %937 = vmatprep.subr.mxu0 0.0
        %938 = vmatpush1.xpose.msra.mxu0 0.0
        %939 = vmatprep.subr.mxu0 0.0
        %940 = vmatpush1.xpose.msra.mxu0 0.0
        %941 = vmatprep.subr.mxu0 0.0
        %942 = vmatpush1.xpose.msra.mxu0 0.0
        %943 = vmatprep.subr.mxu0 0.0
        %944 = vmatpush1.xpose.msra.mxu0 0.0
        %945 = vmatprep.subr.mxu0 0.0
        %946 = vmatpush1.xpose.msra.mxu0 0.0
        %947 = vmatprep.subr.mxu0 0.0
        %948 = vmatpush1.xpose.msra.mxu0 0.0
        %949 = vmatprep.subr.mxu0 0.0
        %950 = vmatpush1.xpose.msra.mxu0 0.0
        %951 = vmatprep.subr.mxu0 0.0
        %952 = vmatpush1.xpose.msra.mxu0 0.0
        %953 = vmatprep.subr.mxu0 0.0
        %954 = vmatpush1.xpose.msra.mxu0 0.0
        %955 = vmatprep.subr.mxu0 0.0
        %956 = vmatpush1.xpose.msra.mxu0 0.0
        %957 = vmatprep.subr.mxu0 0.0
        %958 = vmatpush1.xpose.msra.mxu0 0.0
        %959 = vmatprep.subr.mxu0 0.0
        %960 = vmatpush1.xpose.msra.mxu0 0.0
        %961 = vmatprep.subr.mxu0 0.0
        %962 = vmatpush1.xpose.msra.mxu0 0.0
        %963 = vmatprep.subr.mxu0 0.0
        %964 = vmatpush1.xpose.msra.mxu0 0.0
        %965 = vmatprep.subr.mxu0 0.0
        %966 = vmatpush1.xpose.msra.mxu0 0.0
        %967 = vmatprep.mubr.f32.mxu0 0.0
        %968 = vmatmul.mubr.f32.gmra.mrb[0].mxu0 %v897
        %v969 = vpop.f32.mrb[0].mxu0
        %v970 = vadd.f32 0.0, %v969
        %v971 = vpop.f32.mrb[0].mxu0
        %972 = vmatprep.mubr.f32.mxu0 0.0
        %973 = vmatmul.mubr.f32.gmra.mrb[0].mxu0 %v899
        %v974 = vpop.f32.mrb[0].mxu0
        %v975 = vadd.f32 0.0, %v974
        %v976 = vpop.f32.mrb[0].mxu0
        %977 = vdwg.mxu0
        %v978 = vsel %vm778, %v970, -inf
        %979 = vmax.xlane.f32.xlu0 %v978
        %v980 = vpop.xlane.xlu0 %979
        %v981 = vsel %vm778, %v975, -inf
        %982 = vmax.xlane.f32.xlu0 %v981
        %v983 = vpop.xlane.xlu0 %982
        %v984 = vsub.f32 %v970, %v980
        %v985 = vsub.f32 %v975, %v983
        %v986 = vmul.f32 %v984, 1.442695
        %v987 = vpow.pop %v986
        %v988 = vmul.f32 %v985, 1.442695
        %v989 = vpow.pop %v988
        %v990 = vsel %vm778, %v987, 0.0
        %991 = vadd.xlane.f32.xlu0 %v990
        %v992 = vpop.xlane.xlu0 %991
        %v993 = vsel %vm778, %v989, 0.0
        %994 = vadd.xlane.f32.xlu0 %v993
        %v995 = vpop.xlane.xlu0 %994
        %v996 = vrcp.pop %v992
        %v997 = vrcp.pop %v995
        %v998 = vmul.f32 %v987, %v996
        %v999 = vmul.f32 %v989, %v997
        %v1000 = vld [vmem:[#allocation4] sm:$0xff]
        %1002 = vrot.lane.b32.xlu0 %v1000, 124
        %v1003 = vpop.permute.xlu0 %1002
        %v1006 = vsel %vm778, %v998, 0
        %v1009 = vsel %vm778, %v999, 0
        %1011 = vmatprep.subr.mxu0 0.0
        %1012 = vmatpush1.msra.mxu0 %v1003
        %1013 = vmatprep.subr.mxu0 0.0
        %1014 = vmatpush1.msra.mxu0 0.0
        %1015 = vmatprep.subr.mxu0 0.0
        %1016 = vmatpush1.msra.mxu0 0.0
        %1017 = vmatprep.subr.mxu0 0.0
        %1018 = vmatpush1.msra.mxu0 0.0
        %1019 = vmatprep.subr.mxu0 0.0
        %1020 = vmatpush1.msra.mxu0 0.0
        %1021 = vmatprep.subr.mxu0 0.0
        %1022 = vmatpush1.msra.mxu0 0.0
        %1023 = vmatprep.subr.mxu0 0.0
        %1024 = vmatpush1.msra.mxu0 0.0
        %1025 = vmatprep.subr.mxu0 0.0
        %1026 = vmatpush1.msra.mxu0 0.0
        %1027 = vmatprep.subr.mxu0 0.0
        %1028 = vmatpush1.msra.mxu0 0.0
        %1029 = vmatprep.subr.mxu0 0.0
        %1030 = vmatpush1.msra.mxu0 0.0
        %1031 = vmatprep.subr.mxu0 0.0
        %1032 = vmatpush1.msra.mxu0 0.0
        %1033 = vmatprep.subr.mxu0 0.0
        %1034 = vmatpush1.msra.mxu0 0.0
        %1035 = vmatprep.subr.mxu0 0.0
        %1036 = vmatpush1.msra.mxu0 0.0
        %1037 = vmatprep.subr.mxu0 0.0
        %1038 = vmatpush1.msra.mxu0 0.0
        %1039 = vmatprep.subr.mxu0 0.0
        %1040 = vmatpush1.msra.mxu0 0.0
        %1041 = vmatprep.subr.mxu0 0.0
        %1042 = vmatpush1.msra.mxu0 0.0
        %1043 = vmatprep.subr.mxu0 0.0
        %1044 = vmatpush1.msra.mxu0 0.0
        %1045 = vmatprep.subr.mxu0 0.0
        %1046 = vmatpush1.msra.mxu0 0.0
        %1047 = vmatprep.subr.mxu0 0.0
        %1048 = vmatpush1.msra.mxu0 0.0
        %1049 = vmatprep.subr.mxu0 0.0
        %1050 = vmatpush1.msra.mxu0 0.0
        %1051 = vmatprep.subr.mxu0 0.0
        %1052 = vmatpush1.msra.mxu0 0.0
        %1053 = vmatprep.subr.mxu0 0.0
        %1054 = vmatpush1.msra.mxu0 0.0
        %1055 = vmatprep.subr.mxu0 0.0
        %1056 = vmatpush1.msra.mxu0 0.0
        %1057 = vmatprep.subr.mxu0 0.0
        %1058 = vmatpush1.msra.mxu0 0.0
        %1059 = vmatprep.subr.mxu0 0.0
        %1060 = vmatpush1.msra.mxu0 0.0
        %1061 = vmatprep.subr.mxu0 0.0
        %1062 = vmatpush1.msra.mxu0 0.0
        %1063 = vmatprep.subr.mxu0 0.0
        %1064 = vmatpush1.msra.mxu0 0.0
        %1065 = vmatprep.subr.mxu0 0.0
        %1066 = vmatpush1.msra.mxu0 0.0
        %1067 = vmatprep.subr.mxu0 0.0
        %1068 = vmatpush1.msra.mxu0 0.0
        %1069 = vmatprep.subr.mxu0 0.0
        %1070 = vmatpush1.msra.mxu0 0.0
        %1071 = vmatprep.subr.mxu0 0.0
        %1072 = vmatpush1.msra.mxu0 0.0
        %1073 = vmatprep.subr.mxu0 0.0
        %1074 = vmatpush1.msra.mxu0 0.0
        %1075 = vmatprep.mubr.f32.mxu0 0.0
        %1076 = vmatmul.mubr.f32.gmra.mrb[0].mxu0 %v1006
        %v1077 = vpop.f32.mrb[0].mxu0
        %v1078 = vadd.f32 0.0, %v1077
        %v1079 = vpop.f32.mrb[0].mxu0
        %1080 = vmatprep.mubr.f32.mxu0 0.0
        %1081 = vmatmul.mubr.f32.gmra.mrb[0].mxu0 %v1009
        %v1082 = vpop.f32.mrb[0].mxu0
        %v1083 = vadd.f32 0.0, %v1082
        %v1084 = vpop.f32.mrb[0].mxu0
        %1085 = vdwg.mxu0
        %1088 = vrot.lane.b32.xlu0 %v1078, 4
        %v1089 = vpop.permute.xlu0 %1088
        %1090 = vrot.lane.b32.xlu0 %v1083, 4
        %v1091 = vpop.permute.xlu0 %1090
        %vm1094 = vcmask 64544
        %1095 = vst.msk [vmem:[#allocation5] sm:$0xff] %vm1094, %v1089
        %1096 = vst.msk [vmem:[#allocation5 + $0x8] sm:$0xff] %vm1094, %v1091
        %v1097 = vld [vmem:[#allocation2] sm:$0xff]
        %v1098 = vld [vmem:[#allocation2 + $0x8] sm:$0xff]
        %v1099 = vld [vmem:[#allocation3] sm:$0xff]
        %1102 = vrot.lane.b32.xlu0 %v1097, 120
        %v1103 = vpop.permute.xlu0 %1102
        %1104 = vrot.lane.b32.xlu0 %v1098, 120
        %v1105 = vpop.permute.xlu0 %1104
        %1107 = vrot.lane.b32.xlu0 %v1099, 120
        %v1108 = vpop.permute.xlu0 %1107
        %v1109 = vsel %vm693, %v1103, 0
        %v1111 = vsel %vm693, %v1105, 0
        %v1113 = vsel %vm693, %v1108, 0
        %1115 = vmatprep.subr.mxu0 0.0
        %1116 = vmatpush1.xpose.msra.mxu0 %v1113
        %1117 = vmatprep.subr.mxu0 0.0
        %1118 = vmatpush1.xpose.msra.mxu0 0.0
        %1119 = vmatprep.subr.mxu0 0.0
        %1120 = vmatpush1.xpose.msra.mxu0 0.0
        %1121 = vmatprep.subr.mxu0 0.0
        %1122 = vmatpush1.xpose.msra.mxu0 0.0
        %1123 = vmatprep.subr.mxu0 0.0
        %1124 = vmatpush1.xpose.msra.mxu0 0.0
        %1125 = vmatprep.subr.mxu0 0.0
        %1126 = vmatpush1.xpose.msra.mxu0 0.0
        %1127 = vmatprep.subr.mxu0 0.0
        %1128 = vmatpush1.xpose.msra.mxu0 0.0
        %1129 = vmatprep.subr.mxu0 0.0
        %1130 = vmatpush1.xpose.msra.mxu0 0.0
        %1131 = vmatprep.subr.mxu0 0.0
        %1132 = vmatpush1.xpose.msra.mxu0 0.0
        %1133 = vmatprep.subr.mxu0 0.0
        %1134 = vmatpush1.xpose.msra.mxu0 0.0
        %1135 = vmatprep.subr.mxu0 0.0
        %1136 = vmatpush1.xpose.msra.mxu0 0.0
        %1137 = vmatprep.subr.mxu0 0.0
        %1138 = vmatpush1.xpose.msra.mxu0 0.0
        %1139 = vmatprep.subr.mxu0 0.0
        %1140 = vmatpush1.xpose.msra.mxu0 0.0
        %1141 = vmatprep.subr.mxu0 0.0
        %1142 = vmatpush1.xpose.msra.mxu0 0.0
        %1143 = vmatprep.subr.mxu0 0.0
        %1144 = vmatpush1.xpose.msra.mxu0 0.0
        %1145 = vmatprep.subr.mxu0 0.0
        %1146 = vmatpush1.xpose.msra.mxu0 0.0
        %1147 = vmatprep.subr.mxu0 0.0
        %1148 = vmatpush1.xpose.msra.mxu0 0.0
        %1149 = vmatprep.subr.mxu0 0.0
        %1150 = vmatpush1.xpose.msra.mxu0 0.0
        %1151 = vmatprep.subr.mxu0 0.0
        %1152 = vmatpush1.xpose.msra.mxu0 0.0
        %1153 = vmatprep.subr.mxu0 0.0
        %1154 = vmatpush1.xpose.msra.mxu0 0.0
        %1155 = vmatprep.subr.mxu0 0.0
        %1156 = vmatpush1.xpose.msra.mxu0 0.0
        %1157 = vmatprep.subr.mxu0 0.0
        %1158 = vmatpush1.xpose.msra.mxu0 0.0
        %1159 = vmatprep.subr.mxu0 0.0
        %1160 = vmatpush1.xpose.msra.mxu0 0.0
        %1161 = vmatprep.subr.mxu0 0.0
        %1162 = vmatpush1.xpose.msra.mxu0 0.0
        %1163 = vmatprep.subr.mxu0 0.0
        %1164 = vmatpush1.xpose.msra.mxu0 0.0
        %1165 = vmatprep.subr.mxu0 0.0
        %1166 = vmatpush1.xpose.msra.mxu0 0.0
        %1167 = vmatprep.subr.mxu0 0.0
        %1168 = vmatpush1.xpose.msra.mxu0 0.0
        %1169 = vmatprep.subr.mxu0 0.0
        %1170 = vmatpush1.xpose.msra.mxu0 0.0
        %1171 = vmatprep.subr.mxu0 0.0
        %1172 = vmatpush1.xpose.msra.mxu0 0.0
        %1173 = vmatprep.subr.mxu0 0.0
        %1174 = vmatpush1.xpose.msra.mxu0 0.0
        %1175 = vmatprep.subr.mxu0 0.0
        %1176 = vmatpush1.xpose.msra.mxu0 0.0
        %1177 = vmatprep.subr.mxu0 0.0
        %1178 = vmatpush1.xpose.msra.mxu0 0.0
        %1179 = vmatprep.mubr.f32.mxu0 0.0
        %1180 = vmatmul.mubr.f32.gmra.mrb[0].mxu0 %v1109
        %v1181 = vpop.f32.mrb[0].mxu0
        %v1182 = vadd.f32 0.0, %v1181
        %v1183 = vpop.f32.mrb[0].mxu0
        %1184 = vmatprep.mubr.f32.mxu0 0.0
        %1185 = vmatmul.mubr.f32.gmra.mrb[0].mxu0 %v1111
        %v1186 = vpop.f32.mrb[0].mxu0
        %v1187 = vadd.f32 0.0, %v1186
        %v1188 = vpop.f32.mrb[0].mxu0
        %1189 = vdwg.mxu0
        %v1190 = vsel %vm778, %v1182, -inf
        %1191 = vmax.xlane.f32.xlu0 %v1190
        %v1192 = vpop.xlane.xlu0 %1191
        %v1193 = vsel %vm778, %v1187, -inf
        %1194 = vmax.xlane.f32.xlu0 %v1193
        %v1195 = vpop.xlane.xlu0 %1194
        %v1196 = vsub.f32 %v1182, %v1192
        %v1197 = vsub.f32 %v1187, %v1195
        %v1198 = vmul.f32 %v1196, 1.442695
        %v1199 = vpow.pop %v1198
        %v1200 = vmul.f32 %v1197, 1.442695
        %v1201 = vpow.pop %v1200
        %v1202 = vsel %vm778, %v1199, 0.0
        %1203 = vadd.xlane.f32.xlu0 %v1202
        %v1204 = vpop.xlane.xlu0 %1203
        %v1205 = vsel %vm778, %v1201, 0.0
        %1206 = vadd.xlane.f32.xlu0 %v1205
        %v1207 = vpop.xlane.xlu0 %1206
        %v1208 = vrcp.pop %v1204
        %v1209 = vrcp.pop %v1207
        %v1210 = vmul.f32 %v1199, %v1208
        %v1211 = vmul.f32 %v1201, %v1209
        %v1212 = vld [vmem:[#allocation4] sm:$0xff]
        %1214 = vrot.lane.b32.xlu0 %v1212, 120
        %v1215 = vpop.permute.xlu0 %1214
        %v1218 = vsel %vm778, %v1210, 0
        %v1221 = vsel %vm778, %v1211, 0
        %1223 = vmatprep.subr.mxu0 0.0
        %1224 = vmatpush1.msra.mxu0 %v1215
        %1225 = vmatprep.subr.mxu0 0.0
        %1226 = vmatpush1.msra.mxu0 0.0
        %1227 = vmatprep.subr.mxu0 0.0
        %1228 = vmatpush1.msra.mxu0 0.0
        %1229 = vmatprep.subr.mxu0 0.0
        %1230 = vmatpush1.msra.mxu0 0.0
        %1231 = vmatprep.subr.mxu0 0.0
        %1232 = vmatpush1.msra.mxu0 0.0
        %1233 = vmatprep.subr.mxu0 0.0
        %1234 = vmatpush1.msra.mxu0 0.0
        %1235 = vmatprep.subr.mxu0 0.0
        %1236 = vmatpush1.msra.mxu0 0.0
        %1237 = vmatprep.subr.mxu0 0.0
        %1238 = vmatpush1.msra.mxu0 0.0
        %1239 = vmatprep.subr.mxu0 0.0
        %1240 = vmatpush1.msra.mxu0 0.0
        %1241 = vmatprep.subr.mxu0 0.0
        %1242 = vmatpush1.msra.mxu0 0.0
        %1243 = vmatprep.subr.mxu0 0.0
        %1244 = vmatpush1.msra.mxu0 0.0
        %1245 = vmatprep.subr.mxu0 0.0
        %1246 = vmatpush1.msra.mxu0 0.0
        %1247 = vmatprep.subr.mxu0 0.0
        %1248 = vmatpush1.msra.mxu0 0.0
        %1249 = vmatprep.subr.mxu0 0.0
        %1250 = vmatpush1.msra.mxu0 0.0
        %1251 = vmatprep.subr.mxu0 0.0
        %1252 = vmatpush1.msra.mxu0 0.0
        %1253 = vmatprep.subr.mxu0 0.0
        %1254 = vmatpush1.msra.mxu0 0.0
        %1255 = vmatprep.subr.mxu0 0.0
        %1256 = vmatpush1.msra.mxu0 0.0
        %1257 = vmatprep.subr.mxu0 0.0
        %1258 = vmatpush1.msra.mxu0 0.0
        %1259 = vmatprep.subr.mxu0 0.0
        %1260 = vmatpush1.msra.mxu0 0.0
        %1261 = vmatprep.subr.mxu0 0.0
        %1262 = vmatpush1.msra.mxu0 0.0
        %1263 = vmatprep.subr.mxu0 0.0
        %1264 = vmatpush1.msra.mxu0 0.0
        %1265 = vmatprep.subr.mxu0 0.0
        %1266 = vmatpush1.msra.mxu0 0.0
        %1267 = vmatprep.subr.mxu0 0.0
        %1268 = vmatpush1.msra.mxu0 0.0
        %1269 = vmatprep.subr.mxu0 0.0
        %1270 = vmatpush1.msra.mxu0 0.0
        %1271 = vmatprep.subr.mxu0 0.0
        %1272 = vmatpush1.msra.mxu0 0.0
        %1273 = vmatprep.subr.mxu0 0.0
        %1274 = vmatpush1.msra.mxu0 0.0
        %1275 = vmatprep.subr.mxu0 0.0
        %1276 = vmatpush1.msra.mxu0 0.0
        %1277 = vmatprep.subr.mxu0 0.0
        %1278 = vmatpush1.msra.mxu0 0.0
        %1279 = vmatprep.subr.mxu0 0.0
        %1280 = vmatpush1.msra.mxu0 0.0
        %1281 = vmatprep.subr.mxu0 0.0
        %1282 = vmatpush1.msra.mxu0 0.0
        %1283 = vmatprep.subr.mxu0 0.0
        %1284 = vmatpush1.msra.mxu0 0.0
        %1285 = vmatprep.subr.mxu0 0.0
        %1286 = vmatpush1.msra.mxu0 0.0
        %1287 = vmatprep.mubr.f32.mxu0 0.0
        %1288 = vmatmul.mubr.f32.gmra.mrb[0].mxu0 %v1218
        %v1289 = vpop.f32.mrb[0].mxu0
        %v1290 = vadd.f32 0.0, %v1289
        %v1291 = vpop.f32.mrb[0].mxu0
        %1292 = vmatprep.mubr.f32.mxu0 0.0
        %1293 = vmatmul.mubr.f32.gmra.mrb[0].mxu0 %v1221
        %v1294 = vpop.f32.mrb[0].mxu0
        %v1295 = vadd.f32 0.0, %v1294
        %v1296 = vpop.f32.mrb[0].mxu0
        %1297 = vdwg.mxu0
        %1300 = vrot.lane.b32.xlu0 %v1290, 8
        %v1301 = vpop.permute.xlu0 %1300
        %1302 = vrot.lane.b32.xlu0 %v1295, 8
        %v1303 = vpop.permute.xlu0 %1302
        %vm1306 = vcmask 97344
        %1307 = vst.msk [vmem:[#allocation5] sm:$0xff] %vm1306, %v1301
        %1308 = vst.msk [vmem:[#allocation5 + $0x8] sm:$0xff] %vm1306, %v1303
        %v1309 = vld [vmem:[#allocation2] sm:$0xff]
        %v1310 = vld [vmem:[#allocation2 + $0x8] sm:$0xff]
        %v1311 = vld [vmem:[#allocation3] sm:$0xff]
        %1314 = vrot.lane.b32.xlu0 %v1309, 116
        %v1315 = vpop.permute.xlu0 %1314
        %1316 = vrot.lane.b32.xlu0 %v1310, 116
        %v1317 = vpop.permute.xlu0 %1316
        %1319 = vrot.lane.b32.xlu0 %v1311, 116
        %v1320 = vpop.permute.xlu0 %1319
        %v1321 = vsel %vm693, %v1315, 0
        %v1323 = vsel %vm693, %v1317, 0
        %v1325 = vsel %vm693, %v1320, 0
        %1327 = vmatprep.subr.mxu0 0.0
        %1328 = vmatpush1.xpose.msra.mxu0 %v1325
        %1329 = vmatprep.subr.mxu0 0.0
        %1330 = vmatpush1.xpose.msra.mxu0 0.0
        %1331 = vmatprep.subr.mxu0 0.0
        %1332 = vmatpush1.xpose.msra.mxu0 0.0
        %1333 = vmatprep.subr.mxu0 0.0
        %1334 = vmatpush1.xpose.msra.mxu0 0.0
        %1335 = vmatprep.subr.mxu0 0.0
        %1336 = vmatpush1.xpose.msra.mxu0 0.0
        %1337 = vmatprep.subr.mxu0 0.0
        %1338 = vmatpush1.xpose.msra.mxu0 0.0
        %1339 = vmatprep.subr.mxu0 0.0
        %1340 = vmatpush1.xpose.msra.mxu0 0.0
        %1341 = vmatprep.subr.mxu0 0.0
        %1342 = vmatpush1.xpose.msra.mxu0 0.0
        %1343 = vmatprep.subr.mxu0 0.0
        %1344 = vmatpush1.xpose.msra.mxu0 0.0
        %1345 = vmatprep.subr.mxu0 0.0
        %1346 = vmatpush1.xpose.msra.mxu0 0.0
        %1347 = vmatprep.subr.mxu0 0.0
        %1348 = vmatpush1.xpose.msra.mxu0 0.0
        %1349 = vmatprep.subr.mxu0 0.0
        %1350 = vmatpush1.xpose.msra.mxu0 0.0
        %1351 = vmatprep.subr.mxu0 0.0
        %1352 = vmatpush1.xpose.msra.mxu0 0.0
        %1353 = vmatprep.subr.mxu0 0.0
        %1354 = vmatpush1.xpose.msra.mxu0 0.0
        %1355 = vmatprep.subr.mxu0 0.0
        %1356 = vmatpush1.xpose.msra.mxu0 0.0
        %1357 = vmatprep.subr.mxu0 0.0
        %1358 = vmatpush1.xpose.msra.mxu0 0.0
        %1359 = vmatprep.subr.mxu0 0.0
        %1360 = vmatpush1.xpose.msra.mxu0 0.0
        %1361 = vmatprep.subr.mxu0 0.0
        %1362 = vmatpush1.xpose.msra.mxu0 0.0
        %1363 = vmatprep.subr.mxu0 0.0
        %1364 = vmatpush1.xpose.msra.mxu0 0.0
        %1365 = vmatprep.subr.mxu0 0.0
        %1366 = vmatpush1.xpose.msra.mxu0 0.0
        %1367 = vmatprep.subr.mxu0 0.0
        %1368 = vmatpush1.xpose.msra.mxu0 0.0
        %1369 = vmatprep.subr.mxu0 0.0
        %1370 = vmatpush1.xpose.msra.mxu0 0.0
        %1371 = vmatprep.subr.mxu0 0.0
        %1372 = vmatpush1.xpose.msra.mxu0 0.0
        %1373 = vmatprep.subr.mxu0 0.0
        %1374 = vmatpush1.xpose.msra.mxu0 0.0
        %1375 = vmatprep.subr.mxu0 0.0
        %1376 = vmatpush1.xpose.msra.mxu0 0.0
        %1377 = vmatprep.subr.mxu0 0.0
        %1378 = vmatpush1.xpose.msra.mxu0 0.0
        %1379 = vmatprep.subr.mxu0 0.0
        %1380 = vmatpush1.xpose.msra.mxu0 0.0
        %1381 = vmatprep.subr.mxu0 0.0
        %1382 = vmatpush1.xpose.msra.mxu0 0.0
        %1383 = vmatprep.subr.mxu0 0.0
        %1384 = vmatpush1.xpose.msra.mxu0 0.0
        %1385 = vmatprep.subr.mxu0 0.0
        %1386 = vmatpush1.xpose.msra.mxu0 0.0
        %1387 = vmatprep.subr.mxu0 0.0
        %1388 = vmatpush1.xpose.msra.mxu0 0.0
        %1389 = vmatprep.subr.mxu0 0.0
        %1390 = vmatpush1.xpose.msra.mxu0 0.0
        %1391 = vmatprep.mubr.f32.mxu0 0.0
        %1392 = vmatmul.mubr.f32.gmra.mrb[0].mxu0 %v1321
        %v1393 = vpop.f32.mrb[0].mxu0
        %v1394 = vadd.f32 0.0, %v1393
        %v1395 = vpop.f32.mrb[0].mxu0
        %1396 = vmatprep.mubr.f32.mxu0 0.0
        %1397 = vmatmul.mubr.f32.gmra.mrb[0].mxu0 %v1323
        %v1398 = vpop.f32.mrb[0].mxu0
        %v1399 = vadd.f32 0.0, %v1398
        %v1400 = vpop.f32.mrb[0].mxu0
        %1401 = vdwg.mxu0
        %v1402 = vsel %vm778, %v1394, -inf
        %1403 = vmax.xlane.f32.xlu0 %v1402
        %v1404 = vpop.xlane.xlu0 %1403
        %v1405 = vsel %vm778, %v1399, -inf
        %1406 = vmax.xlane.f32.xlu0 %v1405
        %v1407 = vpop.xlane.xlu0 %1406
        %v1408 = vsub.f32 %v1394, %v1404
        %v1409 = vsub.f32 %v1399, %v1407
        %v1410 = vmul.f32 %v1408, 1.442695
        %v1411 = vpow.pop %v1410
        %v1412 = vmul.f32 %v1409, 1.442695
        %v1413 = vpow.pop %v1412
        %v1414 = vsel %vm778, %v1411, 0.0
        %1415 = vadd.xlane.f32.xlu0 %v1414
        %v1416 = vpop.xlane.xlu0 %1415
        %v1417 = vsel %vm778, %v1413, 0.0
        %1418 = vadd.xlane.f32.xlu0 %v1417
        %v1419 = vpop.xlane.xlu0 %1418
        %v1420 = vrcp.pop %v1416
        %v1421 = vrcp.pop %v1419
        %v1422 = vmul.f32 %v1411, %v1420
        %v1423 = vmul.f32 %v1413, %v1421
        %v1424 = vld [vmem:[#allocation4] sm:$0xff]
        %1426 = vrot.lane.b32.xlu0 %v1424, 116
        %v1427 = vpop.permute.xlu0 %1426
        %v1430 = vsel %vm778, %v1422, 0
        %v1433 = vsel %vm778, %v1423, 0
        %1435 = vmatprep.subr.mxu0 0.0
        %1436 = vmatpush1.msra.mxu0 %v1427
        %1437 = vmatprep.subr.mxu0 0.0
        %1438 = vmatpush1.msra.mxu0 0.0
        %1439 = vmatprep.subr.mxu0 0.0
        %1440 = vmatpush1.msra.mxu0 0.0
        %1441 = vmatprep.subr.mxu0 0.0
        %1442 = vmatpush1.msra.mxu0 0.0
        %1443 = vmatprep.subr.mxu0 0.0
        %1444 = vmatpush1.msra.mxu0 0.0
        %1445 = vmatprep.subr.mxu0 0.0
        %1446 = vmatpush1.msra.mxu0 0.0
        %1447 = vmatprep.subr.mxu0 0.0
        %1448 = vmatpush1.msra.mxu0 0.0
        %1449 = vmatprep.subr.mxu0 0.0
        %1450 = vmatpush1.msra.mxu0 0.0
        %1451 = vmatprep.subr.mxu0 0.0
        %1452 = vmatpush1.msra.mxu0 0.0
        %1453 = vmatprep.subr.mxu0 0.0
        %1454 = vmatpush1.msra.mxu0 0.0
        %1455 = vmatprep.subr.mxu0 0.0
        %1456 = vmatpush1.msra.mxu0 0.0
        %1457 = vmatprep.subr.mxu0 0.0
        %1458 = vmatpush1.msra.mxu0 0.0
        %1459 = vmatprep.subr.mxu0 0.0
        %1460 = vmatpush1.msra.mxu0 0.0
        %1461 = vmatprep.subr.mxu0 0.0
        %1462 = vmatpush1.msra.mxu0 0.0
        %1463 = vmatprep.subr.mxu0 0.0
        %1464 = vmatpush1.msra.mxu0 0.0
        %1465 = vmatprep.subr.mxu0 0.0
        %1466 = vmatpush1.msra.mxu0 0.0
        %1467 = vmatprep.subr.mxu0 0.0
        %1468 = vmatpush1.msra.mxu0 0.0
        %1469 = vmatprep.subr.mxu0 0.0
        %1470 = vmatpush1.msra.mxu0 0.0
        %1471 = vmatprep.subr.mxu0 0.0
        %1472 = vmatpush1.msra.mxu0 0.0
        %1473 = vmatprep.subr.mxu0 0.0
        %1474 = vmatpush1.msra.mxu0 0.0
        %1475 = vmatprep.subr.mxu0 0.0
        %1476 = vmatpush1.msra.mxu0 0.0
        %1477 = vmatprep.subr.mxu0 0.0
        %1478 = vmatpush1.msra.mxu0 0.0
        %1479 = vmatprep.subr.mxu0 0.0
        %1480 = vmatpush1.msra.mxu0 0.0
        %1481 = vmatprep.subr.mxu0 0.0
        %1482 = vmatpush1.msra.mxu0 0.0
        %1483 = vmatprep.subr.mxu0 0.0
        %1484 = vmatpush1.msra.mxu0 0.0
        %1485 = vmatprep.subr.mxu0 0.0
        %1486 = vmatpush1.msra.mxu0 0.0
        %1487 = vmatprep.subr.mxu0 0.0
        %1488 = vmatpush1.msra.mxu0 0.0
        %1489 = vmatprep.subr.mxu0 0.0
        %1490 = vmatpush1.msra.mxu0 0.0
        %1491 = vmatprep.subr.mxu0 0.0
        %1492 = vmatpush1.msra.mxu0 0.0
        %1493 = vmatprep.subr.mxu0 0.0
        %1494 = vmatpush1.msra.mxu0 0.0
        %1495 = vmatprep.subr.mxu0 0.0
        %1496 = vmatpush1.msra.mxu0 0.0
        %1497 = vmatprep.subr.mxu0 0.0
        %1498 = vmatpush1.msra.mxu0 0.0
        %1499 = vmatprep.mubr.f32.mxu0 0.0
        %1500 = vmatmul.mubr.f32.gmra.mrb[0].mxu0 %v1430
        %v1501 = vpop.f32.mrb[0].mxu0
        %v1502 = vadd.f32 0.0, %v1501
        %v1503 = vpop.f32.mrb[0].mxu0
        %1504 = vmatprep.mubr.f32.mxu0 0.0
        %1505 = vmatmul.mubr.f32.gmra.mrb[0].mxu0 %v1433
        %v1506 = vpop.f32.mrb[0].mxu0
        %v1507 = vadd.f32 0.0, %v1506
        %v1508 = vpop.f32.mrb[0].mxu0
        %1509 = vdwg.mxu0
        %1512 = vrot.lane.b32.xlu0 %v1502, 12
        %v1513 = vpop.permute.xlu0 %1512
        %1514 = vrot.lane.b32.xlu0 %v1507, 12
        %v1515 = vpop.permute.xlu0 %1514
        %vm1518 = vcmask 130144
        %1519 = vst.msk [vmem:[#allocation5] sm:$0xff] %vm1518, %v1513
        %1520 = vst.msk [vmem:[#allocation5 + $0x8] sm:$0xff] %vm1518, %v1515
        %v1521 = vld [vmem:[#allocation2] sm:$0xff]
        %v1522 = vld [vmem:[#allocation2 + $0x8] sm:$0xff]
        %v1523 = vld [vmem:[#allocation3] sm:$0xff]
        %1526 = vrot.lane.b32.xlu0 %v1521, 112
        %v1527 = vpop.permute.xlu0 %1526
        %1528 = vrot.lane.b32.xlu0 %v1522, 112
        %v1529 = vpop.permute.xlu0 %1528
        %1531 = vrot.lane.b32.xlu0 %v1523, 112
        %v1532 = vpop.permute.xlu0 %1531
        %v1533 = vsel %vm693, %v1527, 0
        %v1535 = vsel %vm693, %v1529, 0
        %v1537 = vsel %vm693, %v1532, 0
        %1539 = vmatprep.subr.mxu0 0.0
        %1540 = vmatpush1.xpose.msra.mxu0 %v1537
        %1541 = vmatprep.subr.mxu0 0.0
        %1542 = vmatpush1.xpose.msra.mxu0 0.0
        %1543 = vmatprep.subr.mxu0 0.0
        %1544 = vmatpush1.xpose.msra.mxu0 0.0
        %1545 = vmatprep.subr.mxu0 0.0
        %1546 = vmatpush1.xpose.msra.mxu0 0.0
        %1547 = vmatprep.subr.mxu0 0.0
        %1548 = vmatpush1.xpose.msra.mxu0 0.0
        %1549 = vmatprep.subr.mxu0 0.0
        %1550 = vmatpush1.xpose.msra.mxu0 0.0
        %1551 = vmatprep.subr.mxu0 0.0
        %1552 = vmatpush1.xpose.msra.mxu0 0.0
        %1553 = vmatprep.subr.mxu0 0.0
        %1554 = vmatpush1.xpose.msra.mxu0 0.0
        %1555 = vmatprep.subr.mxu0 0.0
        %1556 = vmatpush1.xpose.msra.mxu0 0.0
        %1557 = vmatprep.subr.mxu0 0.0
        %1558 = vmatpush1.xpose.msra.mxu0 0.0
        %1559 = vmatprep.subr.mxu0 0.0
        %1560 = vmatpush1.xpose.msra.mxu0 0.0
        %1561 = vmatprep.subr.mxu0 0.0
        %1562 = vmatpush1.xpose.msra.mxu0 0.0
        %1563 = vmatprep.subr.mxu0 0.0
        %1564 = vmatpush1.xpose.msra.mxu0 0.0
        %1565 = vmatprep.subr.mxu0 0.0
        %1566 = vmatpush1.xpose.msra.mxu0 0.0
        %1567 = vmatprep.subr.mxu0 0.0
        %1568 = vmatpush1.xpose.msra.mxu0 0.0
        %1569 = vmatprep.subr.mxu0 0.0
        %1570 = vmatpush1.xpose.msra.mxu0 0.0
        %1571 = vmatprep.subr.mxu0 0.0
        %1572 = vmatpush1.xpose.msra.mxu0 0.0
        %1573 = vmatprep.subr.mxu0 0.0
        %1574 = vmatpush1.xpose.msra.mxu0 0.0
        %1575 = vmatprep.subr.mxu0 0.0
        %1576 = vmatpush1.xpose.msra.mxu0 0.0
        %1577 = vmatprep.subr.mxu0 0.0
        %1578 = vmatpush1.xpose.msra.mxu0 0.0
        %1579 = vmatprep.subr.mxu0 0.0
        %1580 = vmatpush1.xpose.msra.mxu0 0.0
        %1581 = vmatprep.subr.mxu0 0.0
        %1582 = vmatpush1.xpose.msra.mxu0 0.0
        %1583 = vmatprep.subr.mxu0 0.0
        %1584 = vmatpush1.xpose.msra.mxu0 0.0
        %1585 = vmatprep.subr.mxu0 0.0
        %1586 = vmatpush1.xpose.msra.mxu0 0.0
        %1587 = vmatprep.subr.mxu0 0.0
        %1588 = vmatpush1.xpose.msra.mxu0 0.0
        %1589 = vmatprep.subr.mxu0 0.0
        %1590 = vmatpush1.xpose.msra.mxu0 0.0
        %1591 = vmatprep.subr.mxu0 0.0
        %1592 = vmatpush1.xpose.msra.mxu0 0.0
        %1593 = vmatprep.subr.mxu0 0.0
        %1594 = vmatpush1.xpose.msra.mxu0 0.0
        %1595 = vmatprep.subr.mxu0 0.0
        %1596 = vmatpush1.xpose.msra.mxu0 0.0
        %1597 = vmatprep.subr.mxu0 0.0
        %1598 = vmatpush1.xpose.msra.mxu0 0.0
        %1599 = vmatprep.subr.mxu0 0.0
        %1600 = vmatpush1.xpose.msra.mxu0 0.0
        %1601 = vmatprep.subr.mxu0 0.0
        %1602 = vmatpush1.xpose.msra.mxu0 0.0
        %1603 = vmatprep.mubr.f32.mxu0 0.0
        %1604 = vmatmul.mubr.f32.gmra.mrb[0].mxu0 %v1533
        %v1605 = vpop.f32.mrb[0].mxu0
        %v1606 = vadd.f32 0.0, %v1605
        %v1607 = vpop.f32.mrb[0].mxu0
        %1608 = vmatprep.mubr.f32.mxu0 0.0
        %1609 = vmatmul.mubr.f32.gmra.mrb[0].mxu0 %v1535
        %v1610 = vpop.f32.mrb[0].mxu0
        %v1611 = vadd.f32 0.0, %v1610
        %v1612 = vpop.f32.mrb[0].mxu0
        %1613 = vdwg.mxu0
        %v1614 = vsel %vm778, %v1606, -inf
        %1615 = vmax.xlane.f32.xlu0 %v1614
        %v1616 = vpop.xlane.xlu0 %1615
        %v1617 = vsel %vm778, %v1611, -inf
        %1618 = vmax.xlane.f32.xlu0 %v1617
        %v1619 = vpop.xlane.xlu0 %1618
        %v1620 = vsub.f32 %v1606, %v1616
        %v1621 = vsub.f32 %v1611, %v1619
        %v1622 = vmul.f32 %v1620, 1.442695
        %v1623 = vpow.pop %v1622
        %v1624 = vmul.f32 %v1621, 1.442695
        %v1625 = vpow.pop %v1624
        %v1626 = vsel %vm778, %v1623, 0.0
        %1627 = vadd.xlane.f32.xlu0 %v1626
        %v1628 = vpop.xlane.xlu0 %1627
        %v1629 = vsel %vm778, %v1625, 0.0
        %1630 = vadd.xlane.f32.xlu0 %v1629
        %v1631 = vpop.xlane.xlu0 %1630
        %v1632 = vrcp.pop %v1628
        %v1633 = vrcp.pop %v1631
        %v1634 = vmul.f32 %v1623, %v1632
        %v1635 = vmul.f32 %v1625, %v1633
        %v1636 = vld [vmem:[#allocation4] sm:$0xff]
        %1638 = vrot.lane.b32.xlu0 %v1636, 112
        %v1639 = vpop.permute.xlu0 %1638
        %v1642 = vsel %vm778, %v1634, 0
        %v1645 = vsel %vm778, %v1635, 0
        %1647 = vmatprep.subr.mxu0 0.0
        %1648 = vmatpush1.msra.mxu0 %v1639
        %1649 = vmatprep.subr.mxu0 0.0
        %1650 = vmatpush1.msra.mxu0 0.0
        %1651 = vmatprep.subr.mxu0 0.0
        %1652 = vmatpush1.msra.mxu0 0.0
        %1653 = vmatprep.subr.mxu0 0.0
        %1654 = vmatpush1.msra.mxu0 0.0
        %1655 = vmatprep.subr.mxu0 0.0
        %1656 = vmatpush1.msra.mxu0 0.0
        %1657 = vmatprep.subr.mxu0 0.0
        %1658 = vmatpush1.msra.mxu0 0.0
        %1659 = vmatprep.subr.mxu0 0.0
        %1660 = vmatpush1.msra.mxu0 0.0
        %1661 = vmatprep.subr.mxu0 0.0
        %1662 = vmatpush1.msra.mxu0 0.0
        %1663 = vmatprep.subr.mxu0 0.0
        %1664 = vmatpush1.msra.mxu0 0.0
        %1665 = vmatprep.subr.mxu0 0.0
        %1666 = vmatpush1.msra.mxu0 0.0
        %1667 = vmatprep.subr.mxu0 0.0
        %1668 = vmatpush1.msra.mxu0 0.0
        %1669 = vmatprep.subr.mxu0 0.0
        %1670 = vmatpush1.msra.mxu0 0.0
        %1671 = vmatprep.subr.mxu0 0.0
        %1672 = vmatpush1.msra.mxu0 0.0
        %1673 = vmatprep.subr.mxu0 0.0
        %1674 = vmatpush1.msra.mxu0 0.0
        %1675 = vmatprep.subr.mxu0 0.0
        %1676 = vmatpush1.msra.mxu0 0.0
        %1677 = vmatprep.subr.mxu0 0.0
        %1678 = vmatpush1.msra.mxu0 0.0
        %1679 = vmatprep.subr.mxu0 0.0
        %1680 = vmatpush1.msra.mxu0 0.0
        %1681 = vmatprep.subr.mxu0 0.0
        %1682 = vmatpush1.msra.mxu0 0.0
        %1683 = vmatprep.subr.mxu0 0.0
        %1684 = vmatpush1.msra.mxu0 0.0
        %1685 = vmatprep.subr.mxu0 0.0
        %1686 = vmatpush1.msra.mxu0 0.0
        %1687 = vmatprep.subr.mxu0 0.0
        %1688 = vmatpush1.msra.mxu0 0.0
        %1689 = vmatprep.subr.mxu0 0.0
        %1690 = vmatpush1.msra.mxu0 0.0
        %1691 = vmatprep.subr.mxu0 0.0
        %1692 = vmatpush1.msra.mxu0 0.0
        %1693 = vmatprep.subr.mxu0 0.0
        %1694 = vmatpush1.msra.mxu0 0.0
        %1695 = vmatprep.subr.mxu0 0.0
        %1696 = vmatpush1.msra.mxu0 0.0
        %1697 = vmatprep.subr.mxu0 0.0
        %1698 = vmatpush1.msra.mxu0 0.0
        %1699 = vmatprep.subr.mxu0 0.0
        %1700 = vmatpush1.msra.mxu0 0.0
        %1701 = vmatprep.subr.mxu0 0.0
        %1702 = vmatpush1.msra.mxu0 0.0
        %1703 = vmatprep.subr.mxu0 0.0
        %1704 = vmatpush1.msra.mxu0 0.0
        %1705 = vmatprep.subr.mxu0 0.0
        %1706 = vmatpush1.msra.mxu0 0.0
        %1707 = vmatprep.subr.mxu0 0.0
        %1708 = vmatpush1.msra.mxu0 0.0
        %1709 = vmatprep.subr.mxu0 0.0
        %1710 = vmatpush1.msra.mxu0 0.0
        %1711 = vmatprep.mubr.f32.mxu0 0.0
        %1712 = vmatmul.mubr.f32.gmra.mrb[0].mxu0 %v1642
        %v1713 = vpop.f32.mrb[0].mxu0
        %v1714 = vadd.f32 0.0, %v1713
        %v1715 = vpop.f32.mrb[0].mxu0
        %1716 = vmatprep.mubr.f32.mxu0 0.0
        %1717 = vmatmul.mubr.f32.gmra.mrb[0].mxu0 %v1645
        %v1718 = vpop.f32.mrb[0].mxu0
        %v1719 = vadd.f32 0.0, %v1718
        %v1720 = vpop.f32.mrb[0].mxu0
        %1721 = vdwg.mxu0
        %1724 = vrot.lane.b32.xlu0 %v1714, 16
        %v1725 = vpop.permute.xlu0 %1724
        %1726 = vrot.lane.b32.xlu0 %v1719, 16
        %v1727 = vpop.permute.xlu0 %1726
        %vm1730 = vcmask 162944
        %1731 = vst.msk [vmem:[#allocation5] sm:$0xff] %vm1730, %v1725
        %1732 = vst.msk [vmem:[#allocation5 + $0x8] sm:$0xff] %vm1730, %v1727
        %v1733 = vld [vmem:[#allocation2] sm:$0xff]
        %v1734 = vld [vmem:[#allocation2 + $0x8] sm:$0xff]
        %v1735 = vld [vmem:[#allocation3] sm:$0xff]
        %1738 = vrot.lane.b32.xlu0 %v1733, 108
        %v1739 = vpop.permute.xlu0 %1738
        %1740 = vrot.lane.b32.xlu0 %v1734, 108
        %v1741 = vpop.permute.xlu0 %1740
        %1743 = vrot.lane.b32.xlu0 %v1735, 108
        %v1744 = vpop.permute.xlu0 %1743
        %v1745 = vsel %vm693, %v1739, 0
        %v1747 = vsel %vm693, %v1741, 0
        %v1749 = vsel %vm693, %v1744, 0
        %1751 = vmatprep.subr.mxu0 0.0
        %1752 = vmatpush1.xpose.msra.mxu0 %v1749
        %1753 = vmatprep.subr.mxu0 0.0
        %1754 = vmatpush1.xpose.msra.mxu0 0.0
        %1755 = vmatprep.subr.mxu0 0.0
        %1756 = vmatpush1.xpose.msra.mxu0 0.0
        %1757 = vmatprep.subr.mxu0 0.0
        %1758 = vmatpush1.xpose.msra.mxu0 0.0
        %1759 = vmatprep.subr.mxu0 0.0
        %1760 = vmatpush1.xpose.msra.mxu0 0.0
        %1761 = vmatprep.subr.mxu0 0.0
        %1762 = vmatpush1.xpose.msra.mxu0 0.0
        %1763 = vmatprep.subr.mxu0 0.0
        %1764 = vmatpush1.xpose.msra.mxu0 0.0
        %1765 = vmatprep.subr.mxu0 0.0
        %1766 = vmatpush1.xpose.msra.mxu0 0.0
        %1767 = vmatprep.subr.mxu0 0.0
        %1768 = vmatpush1.xpose.msra.mxu0 0.0
        %1769 = vmatprep.subr.mxu0 0.0
        %1770 = vmatpush1.xpose.msra.mxu0 0.0
        %1771 = vmatprep.subr.mxu0 0.0
        %1772 = vmatpush1.xpose.msra.mxu0 0.0
        %1773 = vmatprep.subr.mxu0 0.0
        %1774 = vmatpush1.xpose.msra.mxu0 0.0
        %1775 = vmatprep.subr.mxu0 0.0
        %1776 = vmatpush1.xpose.msra.mxu0 0.0
        %1777 = vmatprep.subr.mxu0 0.0
        %1778 = vmatpush1.xpose.msra.mxu0 0.0
        %1779 = vmatprep.subr.mxu0 0.0
        %1780 = vmatpush1.xpose.msra.mxu0 0.0
        %1781 = vmatprep.subr.mxu0 0.0
        %1782 = vmatpush1.xpose.msra.mxu0 0.0
        %1783 = vmatprep.subr.mxu0 0.0
        %1784 = vmatpush1.xpose.msra.mxu0 0.0
        %1785 = vmatprep.subr.mxu0 0.0
        %1786 = vmatpush1.xpose.msra.mxu0 0.0
        %1787 = vmatprep.subr.mxu0 0.0
        %1788 = vmatpush1.xpose.msra.mxu0 0.0
        %1789 = vmatprep.subr.mxu0 0.0
        %1790 = vmatpush1.xpose.msra.mxu0 0.0
        %1791 = vmatprep.subr.mxu0 0.0
        %1792 = vmatpush1.xpose.msra.mxu0 0.0
        %1793 = vmatprep.subr.mxu0 0.0
        %1794 = vmatpush1.xpose.msra.mxu0 0.0
        %1795 = vmatprep.subr.mxu0 0.0
        %1796 = vmatpush1.xpose.msra.mxu0 0.0
        %1797 = vmatprep.subr.mxu0 0.0
        %1798 = vmatpush1.xpose.msra.mxu0 0.0
        %1799 = vmatprep.subr.mxu0 0.0
        %1800 = vmatpush1.xpose.msra.mxu0 0.0
        %1801 = vmatprep.subr.mxu0 0.0
        %1802 = vmatpush1.xpose.msra.mxu0 0.0
        %1803 = vmatprep.subr.mxu0 0.0
        %1804 = vmatpush1.xpose.msra.mxu0 0.0
        %1805 = vmatprep.subr.mxu0 0.0
        %1806 = vmatpush1.xpose.msra.mxu0 0.0
        %1807 = vmatprep.subr.mxu0 0.0
        %1808 = vmatpush1.xpose.msra.mxu0 0.0
        %1809 = vmatprep.subr.mxu0 0.0
        %1810 = vmatpush1.xpose.msra.mxu0 0.0
        %1811 = vmatprep.subr.mxu0 0.0
        %1812 = vmatpush1.xpose.msra.mxu0 0.0
        %1813 = vmatprep.subr.mxu0 0.0
        %1814 = vmatpush1.xpose.msra.mxu0 0.0
        %1815 = vmatprep.mubr.f32.mxu0 0.0
        %1816 = vmatmul.mubr.f32.gmra.mrb[0].mxu0 %v1745
        %v1817 = vpop.f32.mrb[0].mxu0
        %v1818 = vadd.f32 0.0, %v1817
        %v1819 = vpop.f32.mrb[0].mxu0
        %1820 = vmatprep.mubr.f32.mxu0 0.0
        %1821 = vmatmul.mubr.f32.gmra.mrb[0].mxu0 %v1747
        %v1822 = vpop.f32.mrb[0].mxu0
        %v1823 = vadd.f32 0.0, %v1822
        %v1824 = vpop.f32.mrb[0].mxu0
        %1825 = vdwg.mxu0
        %v1826 = vsel %vm778, %v1818, -inf
        %1827 = vmax.xlane.f32.xlu0 %v1826
        %v1828 = vpop.xlane.xlu0 %1827
        %v1829 = vsel %vm778, %v1823, -inf
        %1830 = vmax.xlane.f32.xlu0 %v1829
        %v1831 = vpop.xlane.xlu0 %1830
        %v1832 = vsub.f32 %v1818, %v1828
        %v1833 = vsub.f32 %v1823, %v1831
        %v1834 = vmul.f32 %v1832, 1.442695
        %v1835 = vpow.pop %v1834
        %v1836 = vmul.f32 %v1833, 1.442695
        %v1837 = vpow.pop %v1836
        %v1838 = vsel %vm778, %v1835, 0.0
        %1839 = vadd.xlane.f32.xlu0 %v1838
        %v1840 = vpop.xlane.xlu0 %1839
        %v1841 = vsel %vm778, %v1837, 0.0
        %1842 = vadd.xlane.f32.xlu0 %v1841
        %v1843 = vpop.xlane.xlu0 %1842
        %v1844 = vrcp.pop %v1840
        %v1845 = vrcp.pop %v1843
        %v1846 = vmul.f32 %v1835, %v1844
        %v1847 = vmul.f32 %v1837, %v1845
        %v1848 = vld [vmem:[#allocation4] sm:$0xff]
        %1850 = vrot.lane.b32.xlu0 %v1848, 108
        %v1851 = vpop.permute.xlu0 %1850
        %v1854 = vsel %vm778, %v1846, 0
        %v1857 = vsel %vm778, %v1847, 0
        %1859 = vmatprep.subr.mxu0 0.0
        %1860 = vmatpush1.msra.mxu0 %v1851
        %1861 = vmatprep.subr.mxu0 0.0
        %1862 = vmatpush1.msra.mxu0 0.0
        %1863 = vmatprep.subr.mxu0 0.0
        %1864 = vmatpush1.msra.mxu0 0.0
        %1865 = vmatprep.subr.mxu0 0.0
        %1866 = vmatpush1.msra.mxu0 0.0
        %1867 = vmatprep.subr.mxu0 0.0
        %1868 = vmatpush1.msra.mxu0 0.0
        %1869 = vmatprep.subr.mxu0 0.0
        %1870 = vmatpush1.msra.mxu0 0.0
        %1871 = vmatprep.subr.mxu0 0.0
        %1872 = vmatpush1.msra.mxu0 0.0
        %1873 = vmatprep.subr.mxu0 0.0
        %1874 = vmatpush1.msra.mxu0 0.0
        %1875 = vmatprep.subr.mxu0 0.0
        %1876 = vmatpush1.msra.mxu0 0.0
        %1877 = vmatprep.subr.mxu0 0.0
        %1878 = vmatpush1.msra.mxu0 0.0
        %1879 = vmatprep.subr.mxu0 0.0
        %1880 = vmatpush1.msra.mxu0 0.0
        %1881 = vmatprep.subr.mxu0 0.0
        %1882 = vmatpush1.msra.mxu0 0.0
        %1883 = vmatprep.subr.mxu0 0.0
        %1884 = vmatpush1.msra.mxu0 0.0
        %1885 = vmatprep.subr.mxu0 0.0
        %1886 = vmatpush1.msra.mxu0 0.0
        %1887 = vmatprep.subr.mxu0 0.0
        %1888 = vmatpush1.msra.mxu0 0.0
        %1889 = vmatprep.subr.mxu0 0.0
        %1890 = vmatpush1.msra.mxu0 0.0
        %1891 = vmatprep.subr.mxu0 0.0
        %1892 = vmatpush1.msra.mxu0 0.0
        %1893 = vmatprep.subr.mxu0 0.0
        %1894 = vmatpush1.msra.mxu0 0.0
        %1895 = vmatprep.subr.mxu0 0.0
        %1896 = vmatpush1.msra.mxu0 0.0
        %1897 = vmatprep.subr.mxu0 0.0
        %1898 = vmatpush1.msra.mxu0 0.0
        %1899 = vmatprep.subr.mxu0 0.0
        %1900 = vmatpush1.msra.mxu0 0.0
        %1901 = vmatprep.subr.mxu0 0.0
        %1902 = vmatpush1.msra.mxu0 0.0
        %1903 = vmatprep.subr.mxu0 0.0
        %1904 = vmatpush1.msra.mxu0 0.0
        %1905 = vmatprep.subr.mxu0 0.0
        %1906 = vmatpush1.msra.mxu0 0.0
        %1907 = vmatprep.subr.mxu0 0.0
        %1908 = vmatpush1.msra.mxu0 0.0
        %1909 = vmatprep.subr.mxu0 0.0
        %1910 = vmatpush1.msra.mxu0 0.0
        %1911 = vmatprep.subr.mxu0 0.0
        %1912 = vmatpush1.msra.mxu0 0.0
        %1913 = vmatprep.subr.mxu0 0.0
        %1914 = vmatpush1.msra.mxu0 0.0
        %1915 = vmatprep.subr.mxu0 0.0
        %1916 = vmatpush1.msra.mxu0 0.0
        %1917 = vmatprep.subr.mxu0 0.0
        %1918 = vmatpush1.msra.mxu0 0.0
        %1919 = vmatprep.subr.mxu0 0.0
        %1920 = vmatpush1.msra.mxu0 0.0
        %1921 = vmatprep.subr.mxu0 0.0
        %1922 = vmatpush1.msra.mxu0 0.0
        %1923 = vmatprep.mubr.f32.mxu0 0.0
        %1924 = vmatmul.mubr.f32.gmra.mrb[0].mxu0 %v1854
        %v1925 = vpop.f32.mrb[0].mxu0
        %v1926 = vadd.f32 0.0, %v1925
        %v1927 = vpop.f32.mrb[0].mxu0
        %1928 = vmatprep.mubr.f32.mxu0 0.0
        %1929 = vmatmul.mubr.f32.gmra.mrb[0].mxu0 %v1857
        %v1930 = vpop.f32.mrb[0].mxu0
        %v1931 = vadd.f32 0.0, %v1930
        %v1932 = vpop.f32.mrb[0].mxu0
        %1933 = vdwg.mxu0
        %1936 = vrot.lane.b32.xlu0 %v1926, 20
        %v1937 = vpop.permute.xlu0 %1936
        %1938 = vrot.lane.b32.xlu0 %v1931, 20
        %v1939 = vpop.permute.xlu0 %1938
        %vm1942 = vcmask 195744
        %1943 = vst.msk [vmem:[#allocation5] sm:$0xff] %vm1942, %v1937
        %1944 = vst.msk [vmem:[#allocation5 + $0x8] sm:$0xff] %vm1942, %v1939
        %v1945 = vld [vmem:[#allocation2] sm:$0xff]
        %v1946 = vld [vmem:[#allocation2 + $0x8] sm:$0xff]
        %v1947 = vld [vmem:[#allocation3] sm:$0xff]
        %1950 = vrot.lane.b32.xlu0 %v1945, 104
        %v1951 = vpop.permute.xlu0 %1950
        %1952 = vrot.lane.b32.xlu0 %v1946, 104
        %v1953 = vpop.permute.xlu0 %1952
        %1955 = vrot.lane.b32.xlu0 %v1947, 104
        %v1956 = vpop.permute.xlu0 %1955
        %v1957 = vsel %vm693, %v1951, 0
        %v1959 = vsel %vm693, %v1953, 0
        %v1961 = vsel %vm693, %v1956, 0
        %1963 = vmatprep.subr.mxu0 0.0
        %1964 = vmatpush1.xpose.msra.mxu0 %v1961
        %1965 = vmatprep.subr.mxu0 0.0
        %1966 = vmatpush1.xpose.msra.mxu0 0.0
        %1967 = vmatprep.subr.mxu0 0.0
        %1968 = vmatpush1.xpose.msra.mxu0 0.0
        %1969 = vmatprep.subr.mxu0 0.0
        %1970 = vmatpush1.xpose.msra.mxu0 0.0
        %1971 = vmatprep.subr.mxu0 0.0
        %1972 = vmatpush1.xpose.msra.mxu0 0.0
        %1973 = vmatprep.subr.mxu0 0.0
        %1974 = vmatpush1.xpose.msra.mxu0 0.0
        %1975 = vmatprep.subr.mxu0 0.0
        %1976 = vmatpush1.xpose.msra.mxu0 0.0
        %1977 = vmatprep.subr.mxu0 0.0
        %1978 = vmatpush1.xpose.msra.mxu0 0.0
        %1979 = vmatprep.subr.mxu0 0.0
        %1980 = vmatpush1.xpose.msra.mxu0 0.0
        %1981 = vmatprep.subr.mxu0 0.0
        %1982 = vmatpush1.xpose.msra.mxu0 0.0
        %1983 = vmatprep.subr.mxu0 0.0
        %1984 = vmatpush1.xpose.msra.mxu0 0.0
        %1985 = vmatprep.subr.mxu0 0.0
        %1986 = vmatpush1.xpose.msra.mxu0 0.0
        %1987 = vmatprep.subr.mxu0 0.0
        %1988 = vmatpush1.xpose.msra.mxu0 0.0
        %1989 = vmatprep.subr.mxu0 0.0
        %1990 = vmatpush1.xpose.msra.mxu0 0.0
        %1991 = vmatprep.subr.mxu0 0.0
        %1992 = vmatpush1.xpose.msra.mxu0 0.0
        %1993 = vmatprep.subr.mxu0 0.0
        %1994 = vmatpush1.xpose.msra.mxu0 0.0
        %1995 = vmatprep.subr.mxu0 0.0
        %1996 = vmatpush1.xpose.msra.mxu0 0.0
        %1997 = vmatprep.subr.mxu0 0.0
        %1998 = vmatpush1.xpose.msra.mxu0 0.0
        %1999 = vmatprep.subr.mxu0 0.0
        %2000 = vmatpush1.xpose.msra.mxu0 0.0
        %2001 = vmatprep.subr.mxu0 0.0
        %2002 = vmatpush1.xpose.msra.mxu0 0.0
        %2003 = vmatprep.subr.mxu0 0.0
        %2004 = vmatpush1.xpose.msra.mxu0 0.0
        %2005 = vmatprep.subr.mxu0 0.0
        %2006 = vmatpush1.xpose.msra.mxu0 0.0
        %2007 = vmatprep.subr.mxu0 0.0
        %2008 = vmatpush1.xpose.msra.mxu0 0.0
        %2009 = vmatprep.subr.mxu0 0.0
        %2010 = vmatpush1.xpose.msra.mxu0 0.0
        %2011 = vmatprep.subr.mxu0 0.0
        %2012 = vmatpush1.xpose.msra.mxu0 0.0
        %2013 = vmatprep.subr.mxu0 0.0
        %2014 = vmatpush1.xpose.msra.mxu0 0.0
        %2015 = vmatprep.subr.mxu0 0.0
        %2016 = vmatpush1.xpose.msra.mxu0 0.0
        %2017 = vmatprep.subr.mxu0 0.0
        %2018 = vmatpush1.xpose.msra.mxu0 0.0
        %2019 = vmatprep.subr.mxu0 0.0
        %2020 = vmatpush1.xpose.msra.mxu0 0.0
        %2021 = vmatprep.subr.mxu0 0.0
        %2022 = vmatpush1.xpose.msra.mxu0 0.0
        %2023 = vmatprep.subr.mxu0 0.0
        %2024 = vmatpush1.xpose.msra.mxu0 0.0
        %2025 = vmatprep.subr.mxu0 0.0
        %2026 = vmatpush1.xpose.msra.mxu0 0.0
        %2027 = vmatprep.mubr.f32.mxu0 0.0
        %2028 = vmatmul.mubr.f32.gmra.mrb[0].mxu0 %v1957
        %v2029 = vpop.f32.mrb[0].mxu0
        %v2030 = vadd.f32 0.0, %v2029
        %v2031 = vpop.f32.mrb[0].mxu0
        %2032 = vmatprep.mubr.f32.mxu0 0.0
        %2033 = vmatmul.mubr.f32.gmra.mrb[0].mxu0 %v1959
        %v2034 = vpop.f32.mrb[0].mxu0
        %v2035 = vadd.f32 0.0, %v2034
        %v2036 = vpop.f32.mrb[0].mxu0
        %2037 = vdwg.mxu0
        %v2038 = vsel %vm778, %v2030, -inf
        %2039 = vmax.xlane.f32.xlu0 %v2038
        %v2040 = vpop.xlane.xlu0 %2039
        %v2041 = vsel %vm778, %v2035, -inf
        %2042 = vmax.xlane.f32.xlu0 %v2041
        %v2043 = vpop.xlane.xlu0 %2042
        %v2044 = vsub.f32 %v2030, %v2040
        %v2045 = vsub.f32 %v2035, %v2043
        %v2046 = vmul.f32 %v2044, 1.442695
        %v2047 = vpow.pop %v2046
        %v2048 = vmul.f32 %v2045, 1.442695
        %v2049 = vpow.pop %v2048
        %v2050 = vsel %vm778, %v2047, 0.0
        %2051 = vadd.xlane.f32.xlu0 %v2050
        %v2052 = vpop.xlane.xlu0 %2051
        %v2053 = vsel %vm778, %v2049, 0.0
        %2054 = vadd.xlane.f32.xlu0 %v2053
        %v2055 = vpop.xlane.xlu0 %2054
        %v2056 = vrcp.pop %v2052
        %v2057 = vrcp.pop %v2055
        %v2058 = vmul.f32 %v2047, %v2056
        %v2059 = vmul.f32 %v2049, %v2057
        %v2060 = vld [vmem:[#allocation4] sm:$0xff]
        %2062 = vrot.lane.b32.xlu0 %v2060, 104
        %v2063 = vpop.permute.xlu0 %2062
        %v2066 = vsel %vm778, %v2058, 0
        %v2069 = vsel %vm778, %v2059, 0
        %2071 = vmatprep.subr.mxu0 0.0
        %2072 = vmatpush1.msra.mxu0 %v2063
        %2073 = vmatprep.subr.mxu0 0.0
        %2074 = vmatpush1.msra.mxu0 0.0
        %2075 = vmatprep.subr.mxu0 0.0
        %2076 = vmatpush1.msra.mxu0 0.0
        %2077 = vmatprep.subr.mxu0 0.0
        %2078 = vmatpush1.msra.mxu0 0.0
        %2079 = vmatprep.subr.mxu0 0.0
        %2080 = vmatpush1.msra.mxu0 0.0
        %2081 = vmatprep.subr.mxu0 0.0
        %2082 = vmatpush1.msra.mxu0 0.0
        %2083 = vmatprep.subr.mxu0 0.0
        %2084 = vmatpush1.msra.mxu0 0.0
        %2085 = vmatprep.subr.mxu0 0.0
        %2086 = vmatpush1.msra.mxu0 0.0
        %2087 = vmatprep.subr.mxu0 0.0
        %2088 = vmatpush1.msra.mxu0 0.0
        %2089 = vmatprep.subr.mxu0 0.0
        %2090 = vmatpush1.msra.mxu0 0.0
        %2091 = vmatprep.subr.mxu0 0.0
        %2092 = vmatpush1.msra.mxu0 0.0
        %2093 = vmatprep.subr.mxu0 0.0
        %2094 = vmatpush1.msra.mxu0 0.0
        %2095 = vmatprep.subr.mxu0 0.0
        %2096 = vmatpush1.msra.mxu0 0.0
        %2097 = vmatprep.subr.mxu0 0.0
        %2098 = vmatpush1.msra.mxu0 0.0
        %2099 = vmatprep.subr.mxu0 0.0
        %2100 = vmatpush1.msra.mxu0 0.0
        %2101 = vmatprep.subr.mxu0 0.0
        %2102 = vmatpush1.msra.mxu0 0.0
        %2103 = vmatprep.subr.mxu0 0.0
        %2104 = vmatpush1.msra.mxu0 0.0
        %2105 = vmatprep.subr.mxu0 0.0
        %2106 = vmatpush1.msra.mxu0 0.0
        %2107 = vmatprep.subr.mxu0 0.0
        %2108 = vmatpush1.msra.mxu0 0.0
        %2109 = vmatprep.subr.mxu0 0.0
        %2110 = vmatpush1.msra.mxu0 0.0
        %2111 = vmatprep.subr.mxu0 0.0
        %2112 = vmatpush1.msra.mxu0 0.0
        %2113 = vmatprep.subr.mxu0 0.0
        %2114 = vmatpush1.msra.mxu0 0.0
        %2115 = vmatprep.subr.mxu0 0.0
        %2116 = vmatpush1.msra.mxu0 0.0
        %2117 = vmatprep.subr.mxu0 0.0
        %2118 = vmatpush1.msra.mxu0 0.0
        %2119 = vmatprep.subr.mxu0 0.0
        %2120 = vmatpush1.msra.mxu0 0.0
        %2121 = vmatprep.subr.mxu0 0.0
        %2122 = vmatpush1.msra.mxu0 0.0
        %2123 = vmatprep.subr.mxu0 0.0
        %2124 = vmatpush1.msra.mxu0 0.0
        %2125 = vmatprep.subr.mxu0 0.0
        %2126 = vmatpush1.msra.mxu0 0.0
        %2127 = vmatprep.subr.mxu0 0.0
        %2128 = vmatpush1.msra.mxu0 0.0
        %2129 = vmatprep.subr.mxu0 0.0
        %2130 = vmatpush1.msra.mxu0 0.0
        %2131 = vmatprep.subr.mxu0 0.0
        %2132 = vmatpush1.msra.mxu0 0.0
        %2133 = vmatprep.subr.mxu0 0.0
        %2134 = vmatpush1.msra.mxu0 0.0
        %2135 = vmatprep.mubr.f32.mxu0 0.0
        %2136 = vmatmul.mubr.f32.gmra.mrb[0].mxu0 %v2066
        %v2137 = vpop.f32.mrb[0].mxu0
        %v2138 = vadd.f32 0.0, %v2137
        %v2139 = vpop.f32.mrb[0].mxu0
        %2140 = vmatprep.mubr.f32.mxu0 0.0
        %2141 = vmatmul.mubr.f32.gmra.mrb[0].mxu0 %v2069
        %v2142 = vpop.f32.mrb[0].mxu0
        %v2143 = vadd.f32 0.0, %v2142
        %v2144 = vpop.f32.mrb[0].mxu0
        %2145 = vdwg.mxu0
        %2148 = vrot.lane.b32.xlu0 %v2138, 24
        %v2149 = vpop.permute.xlu0 %2148
        %2150 = vrot.lane.b32.xlu0 %v2143, 24
        %v2151 = vpop.permute.xlu0 %2150
        %vm2154 = vcmask 228544
        %2155 = vst.msk [vmem:[#allocation5] sm:$0xff] %vm2154, %v2149
        %2156 = vst.msk [vmem:[#allocation5 + $0x8] sm:$0xff] %vm2154, %v2151
        %v2157 = vld [vmem:[#allocation2] sm:$0xff]
        %v2158 = vld [vmem:[#allocation2 + $0x8] sm:$0xff]
        %v2159 = vld [vmem:[#allocation3] sm:$0xff]
        %2162 = vrot.lane.b32.xlu0 %v2157, 100
        %v2163 = vpop.permute.xlu0 %2162
        %2164 = vrot.lane.b32.xlu0 %v2158, 100
        %v2165 = vpop.permute.xlu0 %2164
        %2167 = vrot.lane.b32.xlu0 %v2159, 100
        %v2168 = vpop.permute.xlu0 %2167
        %v2169 = vsel %vm693, %v2163, 0
        %v2171 = vsel %vm693, %v2165, 0
        %v2173 = vsel %vm693, %v2168, 0
        %2175 = vmatprep.subr.mxu0 0.0
        %2176 = vmatpush1.xpose.msra.mxu0 %v2173
        %2177 = vmatprep.subr.mxu0 0.0
        %2178 = vmatpush1.xpose.msra.mxu0 0.0
        %2179 = vmatprep.subr.mxu0 0.0
        %2180 = vmatpush1.xpose.msra.mxu0 0.0
        %2181 = vmatprep.subr.mxu0 0.0
        %2182 = vmatpush1.xpose.msra.mxu0 0.0
        %2183 = vmatprep.subr.mxu0 0.0
        %2184 = vmatpush1.xpose.msra.mxu0 0.0
        %2185 = vmatprep.subr.mxu0 0.0
        %2186 = vmatpush1.xpose.msra.mxu0 0.0
        %2187 = vmatprep.subr.mxu0 0.0
        %2188 = vmatpush1.xpose.msra.mxu0 0.0
        %2189 = vmatprep.subr.mxu0 0.0
        %2190 = vmatpush1.xpose.msra.mxu0 0.0
        %2191 = vmatprep.subr.mxu0 0.0
        %2192 = vmatpush1.xpose.msra.mxu0 0.0
        %2193 = vmatprep.subr.mxu0 0.0
        %2194 = vmatpush1.xpose.msra.mxu0 0.0
        %2195 = vmatprep.subr.mxu0 0.0
        %2196 = vmatpush1.xpose.msra.mxu0 0.0
        %2197 = vmatprep.subr.mxu0 0.0
        %2198 = vmatpush1.xpose.msra.mxu0 0.0
        %2199 = vmatprep.subr.mxu0 0.0
        %2200 = vmatpush1.xpose.msra.mxu0 0.0
        %2201 = vmatprep.subr.mxu0 0.0
        %2202 = vmatpush1.xpose.msra.mxu0 0.0
        %2203 = vmatprep.subr.mxu0 0.0
        %2204 = vmatpush1.xpose.msra.mxu0 0.0
        %2205 = vmatprep.subr.mxu0 0.0
        %2206 = vmatpush1.xpose.msra.mxu0 0.0
        %2207 = vmatprep.subr.mxu0 0.0
        %2208 = vmatpush1.xpose.msra.mxu0 0.0
        %2209 = vmatprep.subr.mxu0 0.0
        %2210 = vmatpush1.xpose.msra.mxu0 0.0
        %2211 = vmatprep.subr.mxu0 0.0
        %2212 = vmatpush1.xpose.msra.mxu0 0.0
        %2213 = vmatprep.subr.mxu0 0.0
        %2214 = vmatpush1.xpose.msra.mxu0 0.0
        %2215 = vmatprep.subr.mxu0 0.0
        %2216 = vmatpush1.xpose.msra.mxu0 0.0
        %2217 = vmatprep.subr.mxu0 0.0
        %2218 = vmatpush1.xpose.msra.mxu0 0.0
        %2219 = vmatprep.subr.mxu0 0.0
        %2220 = vmatpush1.xpose.msra.mxu0 0.0
        %2221 = vmatprep.subr.mxu0 0.0
        %2222 = vmatpush1.xpose.msra.mxu0 0.0
        %2223 = vmatprep.subr.mxu0 0.0
        %2224 = vmatpush1.xpose.msra.mxu0 0.0
        %2225 = vmatprep.subr.mxu0 0.0
        %2226 = vmatpush1.xpose.msra.mxu0 0.0
        %2227 = vmatprep.subr.mxu0 0.0
        %2228 = vmatpush1.xpose.msra.mxu0 0.0
        %2229 = vmatprep.subr.mxu0 0.0
        %2230 = vmatpush1.xpose.msra.mxu0 0.0
        %2231 = vmatprep.subr.mxu0 0.0
        %2232 = vmatpush1.xpose.msra.mxu0 0.0
        %2233 = vmatprep.subr.mxu0 0.0
        %2234 = vmatpush1.xpose.msra.mxu0 0.0
        %2235 = vmatprep.subr.mxu0 0.0
        %2236 = vmatpush1.xpose.msra.mxu0 0.0
        %2237 = vmatprep.subr.mxu0 0.0
        %2238 = vmatpush1.xpose.msra.mxu0 0.0
        %2239 = vmatprep.mubr.f32.mxu0 0.0
        %2240 = vmatmul.mubr.f32.gmra.mrb[0].mxu0 %v2169
        %v2241 = vpop.f32.mrb[0].mxu0
        %v2242 = vadd.f32 0.0, %v2241
        %v2243 = vpop.f32.mrb[0].mxu0
        %2244 = vmatprep.mubr.f32.mxu0 0.0
        %2245 = vmatmul.mubr.f32.gmra.mrb[0].mxu0 %v2171
        %v2246 = vpop.f32.mrb[0].mxu0
        %v2247 = vadd.f32 0.0, %v2246
        %v2248 = vpop.f32.mrb[0].mxu0
        %2249 = vdwg.mxu0
        %v2250 = vsel %vm778, %v2242, -inf
        %2251 = vmax.xlane.f32.xlu0 %v2250
        %v2252 = vpop.xlane.xlu0 %2251
        %v2253 = vsel %vm778, %v2247, -inf
        %2254 = vmax.xlane.f32.xlu0 %v2253
        %v2255 = vpop.xlane.xlu0 %2254
        %v2256 = vsub.f32 %v2242, %v2252
        %v2257 = vsub.f32 %v2247, %v2255
        %v2258 = vmul.f32 %v2256, 1.442695
        %v2259 = vpow.pop %v2258
        %v2260 = vmul.f32 %v2257, 1.442695
        %v2261 = vpow.pop %v2260
        %v2262 = vsel %vm778, %v2259, 0.0
        %2263 = vadd.xlane.f32.xlu0 %v2262
        %v2264 = vpop.xlane.xlu0 %2263
        %v2265 = vsel %vm778, %v2261, 0.0
        %2266 = vadd.xlane.f32.xlu0 %v2265
        %v2267 = vpop.xlane.xlu0 %2266
        %v2268 = vrcp.pop %v2264
        %v2269 = vrcp.pop %v2267
        %v2270 = vmul.f32 %v2259, %v2268
        %v2271 = vmul.f32 %v2261, %v2269
        %v2272 = vld [vmem:[#allocation4] sm:$0xff]
        %2274 = vrot.lane.b32.xlu0 %v2272, 100
        %v2275 = vpop.permute.xlu0 %2274
        %v2278 = vsel %vm778, %v2270, 0
        %v2281 = vsel %vm778, %v2271, 0
        %2283 = vmatprep.subr.mxu0 0.0
        %2284 = vmatpush1.msra.mxu0 %v2275
        %2285 = vmatprep.subr.mxu0 0.0
        %2286 = vmatpush1.msra.mxu0 0.0
        %2287 = vmatprep.subr.mxu0 0.0
        %2288 = vmatpush1.msra.mxu0 0.0
        %2289 = vmatprep.subr.mxu0 0.0
        %2290 = vmatpush1.msra.mxu0 0.0
        %2291 = vmatprep.subr.mxu0 0.0
        %2292 = vmatpush1.msra.mxu0 0.0
        %2293 = vmatprep.subr.mxu0 0.0
        %2294 = vmatpush1.msra.mxu0 0.0
        %2295 = vmatprep.subr.mxu0 0.0
        %2296 = vmatpush1.msra.mxu0 0.0
        %2297 = vmatprep.subr.mxu0 0.0
        %2298 = vmatpush1.msra.mxu0 0.0
        %2299 = vmatprep.subr.mxu0 0.0
        %2300 = vmatpush1.msra.mxu0 0.0
        %2301 = vmatprep.subr.mxu0 0.0
        %2302 = vmatpush1.msra.mxu0 0.0
        %2303 = vmatprep.subr.mxu0 0.0
        %2304 = vmatpush1.msra.mxu0 0.0
        %2305 = vmatprep.subr.mxu0 0.0
        %2306 = vmatpush1.msra.mxu0 0.0
        %2307 = vmatprep.subr.mxu0 0.0
        %2308 = vmatpush1.msra.mxu0 0.0
        %2309 = vmatprep.subr.mxu0 0.0
        %2310 = vmatpush1.msra.mxu0 0.0
        %2311 = vmatprep.subr.mxu0 0.0
        %2312 = vmatpush1.msra.mxu0 0.0
        %2313 = vmatprep.subr.mxu0 0.0
        %2314 = vmatpush1.msra.mxu0 0.0
        %2315 = vmatprep.subr.mxu0 0.0
        %2316 = vmatpush1.msra.mxu0 0.0
        %2317 = vmatprep.subr.mxu0 0.0
        %2318 = vmatpush1.msra.mxu0 0.0
        %2319 = vmatprep.subr.mxu0 0.0
        %2320 = vmatpush1.msra.mxu0 0.0
        %2321 = vmatprep.subr.mxu0 0.0
        %2322 = vmatpush1.msra.mxu0 0.0
        %2323 = vmatprep.subr.mxu0 0.0
        %2324 = vmatpush1.msra.mxu0 0.0
        %2325 = vmatprep.subr.mxu0 0.0
        %2326 = vmatpush1.msra.mxu0 0.0
        %2327 = vmatprep.subr.mxu0 0.0
        %2328 = vmatpush1.msra.mxu0 0.0
        %2329 = vmatprep.subr.mxu0 0.0
        %2330 = vmatpush1.msra.mxu0 0.0
        %2331 = vmatprep.subr.mxu0 0.0
        %2332 = vmatpush1.msra.mxu0 0.0
        %2333 = vmatprep.subr.mxu0 0.0
        %2334 = vmatpush1.msra.mxu0 0.0
        %2335 = vmatprep.subr.mxu0 0.0
        %2336 = vmatpush1.msra.mxu0 0.0
        %2337 = vmatprep.subr.mxu0 0.0
        %2338 = vmatpush1.msra.mxu0 0.0
        %2339 = vmatprep.subr.mxu0 0.0
        %2340 = vmatpush1.msra.mxu0 0.0
        %2341 = vmatprep.subr.mxu0 0.0
        %2342 = vmatpush1.msra.mxu0 0.0
        %2343 = vmatprep.subr.mxu0 0.0
        %2344 = vmatpush1.msra.mxu0 0.0
        %2345 = vmatprep.subr.mxu0 0.0
        %2346 = vmatpush1.msra.mxu0 0.0
        %2347 = vmatprep.mubr.f32.mxu0 0.0
        %2348 = vmatmul.mubr.f32.gmra.mrb[0].mxu0 %v2278
        %v2349 = vpop.f32.mrb[0].mxu0
        %v2350 = vadd.f32 0.0, %v2349
        %v2351 = vpop.f32.mrb[0].mxu0
        %2352 = vmatprep.mubr.f32.mxu0 0.0
        %2353 = vmatmul.mubr.f32.gmra.mrb[0].mxu0 %v2281
        %v2354 = vpop.f32.mrb[0].mxu0
        %v2355 = vadd.f32 0.0, %v2354
        %v2356 = vpop.f32.mrb[0].mxu0
        %2357 = vdwg.mxu0
        %2360 = vrot.lane.b32.xlu0 %v2350, 28
        %v2361 = vpop.permute.xlu0 %2360
        %2362 = vrot.lane.b32.xlu0 %v2355, 28
        %v2363 = vpop.permute.xlu0 %2362
        %vm2366 = vcmask 261344
        %2367 = vst.msk [vmem:[#allocation5] sm:$0xff] %vm2366, %v2361
        %2368 = vst.msk [vmem:[#allocation5 + $0x8] sm:$0xff] %vm2366, %v2363
        %v2369 = vld [vmem:[#allocation5] sm:$0xff]
        %v2370 = vld [vmem:[#allocation5 + $0x8] sm:$0xff]
        %v2371 = vld [vmem:[#allocation14] sm:$0xff]
        %v2372 = vld [vmem:[#allocation14 + $0x8] sm:$0xff]
        %v2373 = vld [vmem:[#allocation14 + $0x10] sm:$0xff]
        %v2374 = vld [vmem:[#allocation14 + $0x18] sm:$0xff]
        %v2375 = vld [vmem:[%s6] sm:$0x1]
        %v2377 = vlaneseq
        %v2378 = vshrl.u32 %v2377, 7
        %v2379 = vsub.s32 0, %v2378
        %v2380 = vrot.slane %v2375, %v2379
        %v2383 = vsel %vm430, %v2369, 0
        %v2386 = vsel %vm430, %v2370, 0
        %2388 = vmatprep.subr.mxu0 0.0
        %2389 = vmatpush1.msra.mxu0 %v2371
        %2390 = vmatprep.subr.mxu0 0.0
        %2391 = vmatpush1.msra.mxu0 %v2372
        %2392 = vmatprep.subr.mxu0 0.0
        %2393 = vmatpush1.msra.mxu0 %v2373
        %2394 = vmatprep.subr.mxu0 0.0
        %2395 = vmatpush1.msra.mxu0 %v2374
        %2396 = vmatprep.subr.mxu0 0.0
        %2397 = vmatpush1.msra.mxu0 0.0
        %2398 = vmatprep.subr.mxu0 0.0
        %2399 = vmatpush1.msra.mxu0 0.0
        %2400 = vmatprep.subr.mxu0 0.0
        %2401 = vmatpush1.msra.mxu0 0.0
        %2402 = vmatprep.subr.mxu0 0.0
        %2403 = vmatpush1.msra.mxu0 0.0
        %2404 = vmatprep.subr.mxu0 0.0
        %2405 = vmatpush1.msra.mxu0 0.0
        %2406 = vmatprep.subr.mxu0 0.0
        %2407 = vmatpush1.msra.mxu0 0.0
        %2408 = vmatprep.subr.mxu0 0.0
        %2409 = vmatpush1.msra.mxu0 0.0
        %2410 = vmatprep.subr.mxu0 0.0
        %2411 = vmatpush1.msra.mxu0 0.0
        %2412 = vmatprep.subr.mxu0 0.0
        %2413 = vmatpush1.msra.mxu0 0.0
        %2414 = vmatprep.subr.mxu0 0.0
        %2415 = vmatpush1.msra.mxu0 0.0
        %2416 = vmatprep.subr.mxu0 0.0
        %2417 = vmatpush1.msra.mxu0 0.0
        %2418 = vmatprep.subr.mxu0 0.0
        %2419 = vmatpush1.msra.mxu0 0.0
        %2420 = vmatprep.subr.mxu0 0.0
        %2421 = vmatpush1.msra.mxu0 0.0
        %2422 = vmatprep.subr.mxu0 0.0
        %2423 = vmatpush1.msra.mxu0 0.0
        %2424 = vmatprep.subr.mxu0 0.0
        %2425 = vmatpush1.msra.mxu0 0.0
        %2426 = vmatprep.subr.mxu0 0.0
        %2427 = vmatpush1.msra.mxu0 0.0
        %2428 = vmatprep.subr.mxu0 0.0
        %2429 = vmatpush1.msra.mxu0 0.0
        %2430 = vmatprep.subr.mxu0 0.0
        %2431 = vmatpush1.msra.mxu0 0.0
        %2432 = vmatprep.subr.mxu0 0.0
        %2433 = vmatpush1.msra.mxu0 0.0
        %2434 = vmatprep.subr.mxu0 0.0
        %2435 = vmatpush1.msra.mxu0 0.0
        %2436 = vmatprep.subr.mxu0 0.0
        %2437 = vmatpush1.msra.mxu0 0.0
        %2438 = vmatprep.subr.mxu0 0.0
        %2439 = vmatpush1.msra.mxu0 0.0
        %2440 = vmatprep.subr.mxu0 0.0
        %2441 = vmatpush1.msra.mxu0 0.0
        %2442 = vmatprep.subr.mxu0 0.0
        %2443 = vmatpush1.msra.mxu0 0.0
        %2444 = vmatprep.subr.mxu0 0.0
        %2445 = vmatpush1.msra.mxu0 0.0
        %2446 = vmatprep.subr.mxu0 0.0
        %2447 = vmatpush1.msra.mxu0 0.0
        %2448 = vmatprep.subr.mxu0 0.0
        %2449 = vmatpush1.msra.mxu0 0.0
        %2450 = vmatprep.subr.mxu0 0.0
        %2451 = vmatpush1.msra.mxu0 0.0
        %2452 = vmatprep.mubr.f32.mxu0 0.0
        %2453 = vmatmul.mubr.f32.gmra.mrb[0].mxu0 %v2383
        %v2454 = vpop.f32.mrb[0].mxu0
        %v2455 = vadd.f32 %v2380, %v2454
        %v2456 = vpop.f32.mrb[0].mxu0
        %2457 = vmatprep.mubr.f32.mxu0 0.0
        %2458 = vmatmul.mubr.f32.gmra.mrb[0].mxu0 %v2386
        %v2459 = vpop.f32.mrb[0].mxu0
        %v2460 = vadd.f32 %v2380, %v2459
        %v2461 = vpop.f32.mrb[0].mxu0
        %2462 = vdwg.mxu0
        %2463 = vst.msk [vmem:[%s414] sm:$0xff] %vm430, %v2455
        %2464 = vst.msk [vmem:[%s414 + $0x8] sm:$0xff] %vm430, %v2460
        %s2465 = sand.u32 %s214, 1
        %s2466 = scalar_lea.sflag [#allocation8], %s2465
        %s2467 = sand.u32 %s214, 1
        %s2468 = smul.addr %s2467, 16
        %s2469 = scalar_lea.vmem [#allocation15], %s2468
        // Predicated region
        $region69: #{tpu_custom_call.1} parent=47 // pred_check
          %p2470 = pneg %p224
        $region70: #{tpu_custom_call.1} parent=47 // pred_check_branch
          %2472 = sbr.rel (%p2470) target = $region72
        $region71: #{tpu_custom_call.1} parent=47 // pred_region
          %s2473 = smul.u32 2, %s33
          %s2475 = ssub.s32 256, 256
          %2476 = vsyncadd %s2466, %s2475
          %s2477 = smul.addr %s32, 2
          %s2478 = sadd.s32 %s2473, %s2477
          %s2479 = smul.addr %s2478, 128
          %s2480 = scalar_lea.hbm %s7, %s2479
          %s2481 = sshll.u32 %s2469, 4
          %s2482 = int_to_ptr.vmem [resolvable:$true] %s2481
          %2487 = dma.vmem_to_hbm [thread:$0]  %s2482, 256, %s2480, %s2466, 128, 128, 8
        $region72: #{tpu_custom_call.1} parent=47 // pred_fallthru
          _
      $region48: #{tpu_custom_call.1} parent=5 // pred_fallthru
        _
      %p2488 = scmp.le.s32.totalorder 2, %s23
      // Predicated region
      $region73: #{tpu_custom_call.1} parent=5 // pred_check
        %p2489 = pneg %p2488
      $region74: #{tpu_custom_call.1} parent=5 // pred_check_branch
        %2491 = sbr.rel (%p2489) target = $region76
      $region75: #{tpu_custom_call.1} parent=5 // pred_region
        %s2492 = ssub.s32 %s23, 2
        // Predicated region
        $region77: #{tpu_custom_call.1} parent=75 // pred_check
          %p2493 = pneg %p230
        $region78: #{tpu_custom_call.1} parent=75 // pred_check_branch
          %2495 = sbr.rel (%p2493) target = $region80
        $region79: #{tpu_custom_call.1} parent=75 // pred_region
          %s2496 = sand.u32 %s215, 1
          %s2497 = scalar_lea.sflag [#allocation8], %s2496
          %s2498 = sand.u32 %s215, 1
          %s2499 = smul.addr %s2498, 16
          %s2500 = scalar_lea.vmem [#allocation15], %s2499
          %2501 = dma.done %s2497, 256
        $region80: #{tpu_custom_call.1} parent=75 // pred_fallthru
          _
      $region76: #{tpu_custom_call.1} parent=5 // pred_fallthru
        _
    $region6: #{tpu_custom_call.1} parent=1 // loop_footer
      %s27 = sadd.s32 1, %s23
    $region7: #{tpu_custom_call.1} parent=1 // loop_footer_branch
      %22 = sbr.rel target = $region3
    $region8: #{tpu_custom_call.1} parent=1 // loop_exit
      _
    %2502 = vsyncpa [#allocation7], 1
    %s2503 = scalar_lea.sflag [#allocation7], 1
    %2504 = vsyncpa %s2503, 1
    %2505 = vsyncpa [#allocation10], 1
    %s2506 = scalar_lea.sflag [#allocation10], 1
    %2507 = vsyncpa %s2506, 1
    %2508 = vsyncpa [#allocation13], 1
    %2509 = vsyncpa [#allocation8], 1
    %s2510 = scalar_lea.sflag [#allocation8], 1
    %2511 = vsyncpa %s2510, 1

</llo_original>
